<compile_context>
chip_gen: v5e
topology: v5e:2x2
jax: 0.10.0
libtpu: 0.0.40
codegen_flags: <defaults>
</compile_context>

<pallas_src>
import functools

import jax
import jax.numpy as jnp
from jax.experimental import pallas as pl
from jax.experimental.pallas import tpu as pltpu

H1 = 1024      # fc1 width
H2 = 265       # fc2 width (PyTorch module)
H2_PAD = 384   # 265 zero-padded to a multiple of 128 lanes


def _round_up(x, m):
    return ((x + m - 1) // m) * m


def _policy_kernel(x_ref, w1_ref, b1_ref, w2_ref, b2_ref, wh_ref, bh_ref,
                   out_ref, *, dim):
    # State arrives lane-dense as (1, bt). Rebuild the (bt, 1) batch column
    # with a small, fully tile-aligned XLU transpose: broadcast the row to 8
    # sublanes, transpose the (8, bt) tile, keep lane 0.
    x_row = x_ref[...]                                              # (1, bt)
    x_col = jnp.transpose(
        jnp.broadcast_to(x_row, (8, x_row.shape[1])))[:, :1]        # (bt, 1)

    # fc1: Linear(1, 1024). K == 1, so x @ W1 is a broadcast outer product —
    # do it on the VPU instead of paying an MXU push/pop for a degenerate K.
    h1 = jnp.maximum(x_col * w1_ref[...] + b1_ref[...], 0.0)        # (bt, H1)

    # fc2 on the MXU: bf16 operands, f32 accumulation.
    h2 = jnp.dot(h1.astype(jnp.bfloat16), w2_ref[...],
                 preferred_element_type=jnp.float32)
    h2 = jnp.maximum(h2 + b2_ref[...], 0.0)                         # (bt, H2_PAD)

    # Fused mean/log_std heads, computed directly in the transposed
    # (lane-dense) orientation: (2*dim, H2P) x (bt, H2P)^T -> (2*dim, bt).
    heads_t = jax.lax.dot_general(
        wh_ref[...], h2.astype(jnp.bfloat16),
        dimension_numbers=(((1,), (1,)), ((), ())),
        preferred_element_type=jnp.float32)
    heads_t = heads_t + bh_ref[...]                                 # (2*dim, bt)

    # Sublane rows [0, dim) hold mean; rows [dim, 2*dim) hold log_std -> std.
    row = jax.lax.broadcasted_iota(jnp.int32, heads_t.shape, 0)
    std = jnp.exp(jnp.clip(heads_t, -20.0, 2.0))
    out_ref[...] = jnp.where(row >= dim, std, heads_t).astype(out_ref.dtype)


def policy_network_forward(state, params, *, block_b=512):
    """Full PolicyNetwork forward pass in one Pallas call.

    state:  (B, 1) float32
    params: dict from init_params (kernel-packed layout/dtypes)
    returns (mean, std), each (B, dim) float32
    """
    B = state.shape[0]
    dim = params["b_heads"].shape[0] // 2

    # Batch tile: must be a multiple of 128 (lane-dense input/output blocks).
    # Pick it so the grid has >= 2 blocks whenever B allows, so the "parallel"
    # axis can be sharded across both TensorCores on v7x.
    block_b = max(128, (int(block_b) // 128) * 128)
    bt = min(block_b, _round_up(pl.cdiv(B, 2), 128))
    n_blocks = pl.cdiv(B, bt)
    b_pad = n_blocks * bt

    # Lane-major (1, b_pad) state: dense HBM tile, dense per-step DMA.
    x = jnp.reshape(state.astype(jnp.float32), (B,))
    if b_pad != B:
        x = jnp.pad(x, (0, b_pad - B))
    x = jnp.reshape(x, (1, b_pad))

    out = pl.pallas_call(
        functools.partial(_policy_kernel, dim=dim),
        grid=(n_blocks,),
        in_specs=[
            pl.BlockSpec((1, bt), lambda i: (0, i)),            # state (lane-dense)
            pl.BlockSpec((1, H1), lambda i: (0, 0)),            # w1 (resident)
            pl.BlockSpec((1, H1), lambda i: (0, 0)),            # b1
            pl.BlockSpec((H1, H2_PAD), lambda i: (0, 0)),       # w2 (bf16)
            pl.BlockSpec((1, H2_PAD), lambda i: (0, 0)),        # b2
            pl.BlockSpec((2 * dim, H2_PAD), lambda i: (0, 0)),  # w_heads^T (bf16)
            pl.BlockSpec((2 * dim, 1), lambda i: (0, 0)),       # b_heads column
        ],
        out_specs=pl.BlockSpec((2 * dim, bt), lambda i: (0, i)),
        out_shape=jax.ShapeDtypeStruct((2 * dim, b_pad), jnp.float32),
        compiler_params=pltpu.CompilerParams(
            dimension_semantics=("parallel",)),
    )(x, params["w1"], params["b1"], params["w2"], params["b2"],
      params["w_heads"], params["b_heads"])

    mean = out[:dim, :B].T        # (B, dim)
    std = out[dim:, :B].T         # (B, dim)
    return mean, std


def init_params(key, dim):
    """nn.Linear-style init (U[-1/sqrt(fan_in), 1/sqrt(fan_in)]), kernel-packed.

    Layout:
      w1      (1, 1024)        f32   fc1 weight, stored (in, out)
      b1      (1, 1024)        f32
      w2      (1024, 384)      bf16  fc2 weight; cols 265..383 are zeros
      b2      (1, 384)         f32   cols 265..383 are zeros
      w_heads (2*dim, 384)     bf16  [mean ; log_std] weights, pre-transposed;
                                     cols 265..383 zeros
      b_heads (2*dim, 1)       f32   column bias for the transposed heads
    """
    def linear(key, fan_in, fan_out):
        kw, kb = jax.random.split(key)
        bound = 1.0 / jnp.sqrt(jnp.float32(fan_in))
        w = jax.random.uniform(kw, (fan_in, fan_out), jnp.float32, -bound, bound)
        b = jax.random.uniform(kb, (1, fan_out), jnp.float32, -bound, bound)
        return w, b

    k1, k2, k3, k4 = jax.random.split(key, 4)
    w1, b1 = linear(k1, 1, H1)
    w2, b2 = linear(k2, H1, H2)
    wm, bm = linear(k3, H2, dim)
    ws, bs = linear(k4, H2, dim)

    # Zero-pad the 265-wide hidden dim to 384 (lane-aligned). Padded hidden
    # units are exactly zero after relu, so the math is unchanged.
    pad = H2_PAD - H2
    w2p = jnp.pad(w2, ((0, 0), (0, pad))).astype(jnp.bfloat16)
    b2p = jnp.pad(b2, ((0, 0), (0, pad)))
    w_heads = jnp.pad(jnp.concatenate([wm, ws], axis=1),
                      ((0, pad), (0, 0))).T.astype(jnp.bfloat16)     # (2*dim, 384)
    b_heads = jnp.concatenate([bm, bs], axis=1).T                    # (2*dim, 1)

    return {"w1": w1, "b1": b1, "w2": w2p, "b2": b2p,
            "w_heads": w_heads, "b_heads": b_heads}


def _reference_forward(state, p):
    # Same math as the kernel (including bf16 quantization of w2/w_heads and
    # the bf16 rounding of h1/h2 feeding the MXU), in plain JAX.
    dim = p["b_heads"].shape[0] // 2
    h1 = jnp.maximum(state * p["w1"] + p["b1"], 0.0)
    h1 = h1.astype(jnp.bfloat16).astype(jnp.float32)
    h2 = jnp.maximum(h1 @ p["w2"].astype(jnp.float32) + p["b2"], 0.0)
    h2 = h2.astype(jnp.bfloat16).astype(jnp.float32)
    heads = h2 @ p["w_heads"].astype(jnp.float32).T + p["b_heads"].T
    mean = heads[:, :dim]
    std = jnp.exp(jnp.clip(heads[:, dim:], -20.0, 2.0))
    return mean, std


if __name__ == "__main__":
    key = jax.random.PRNGKey(0)
    k_state, k_params = jax.random.split(key)

    B, DIM = 8, 4
    state = jax.random.normal(k_state, (B, 1), jnp.float32)
    params = init_params(k_params, DIM)

    mean, std = policy_network_forward(state, params)
    jax.block_until_ready((mean, std))

    ref_mean, ref_std = _reference_forward(state, params)
    assert mean.shape == (B, DIM) and std.shape == (B, DIM)
    assert jnp.allclose(mean, ref_mean, atol=1e-2, rtol=1e-2), (
        float(jnp.max(jnp.abs(mean - ref_mean))))
    assert jnp.allclose(std, ref_std, atol=1e-2, rtol=1e-2), (
        float(jnp.max(jnp.abs(std - ref_std))))

    # TODO(synk): PolicyNetwork.sample() (rsample + tanh squash + log_prob) is
    # not part of forward(); not implemented in-kernel.
    # TODO(synk): chip-gated weight quantization of w2 (int8 on v5e/v6e, fp8 on
    # v7x) would halve the dominant weight DMA; kept portable bf16 here.
    # TODO(synk): for per-step RL inference at tiny B, keep weights resident
    # across calls (cross-pallas_call VMEM/semaphore future) or batch env
    # steps, instead of re-DMAing ~0.8 MiB of weights per call.

    print("KERNEL_OK")
</pallas_src>

<mosaic_0001>
module attributes {stable_mosaic.version = 11 : i64} {
  func.func @_policy_kernel(%arg0: i32, %arg1: memref<1x128xf32, #tpu.memory_space<vmem>>, %arg2: memref<1x1024xf32, #tpu.memory_space<vmem>>, %arg3: memref<1x1024xf32, #tpu.memory_space<vmem>>, %arg4: memref<1024x384xbf16, #tpu.memory_space<vmem>>, %arg5: memref<1x384xf32, #tpu.memory_space<vmem>>, %arg6: memref<8x384xbf16, #tpu.memory_space<vmem>>, %arg7: memref<8x1xf32, #tpu.memory_space<vmem>>, %arg8: memref<8x128xf32, #tpu.memory_space<vmem>>) attributes {dimension_semantics = [#tpu.dimension_semantics<parallel>], iteration_bounds = array<i64: 1>, scalar_prefetch = 0 : i64, scratch_operands = 0 : i64, tpu.core_type = #tpu.core_type<tc>, window_params = [{transform_indices = @transform_0, window_bounds = array<i64: 1, 128>}, {pipeline_mode = #tpu.pipeline_mode<synchronous>, transform_indices = @transform_1, window_bounds = array<i64: 1, 1024>}, {pipeline_mode = #tpu.pipeline_mode<synchronous>, transform_indices = @transform_2, window_bounds = array<i64: 1, 1024>}, {pipeline_mode = #tpu.pipeline_mode<synchronous>, transform_indices = @transform_3, window_bounds = array<i64: 1024, 384>}, {pipeline_mode = #tpu.pipeline_mode<synchronous>, transform_indices = @transform_4, window_bounds = array<i64: 1, 384>}, {pipeline_mode = #tpu.pipeline_mode<synchronous>, transform_indices = @transform_5, window_bounds = array<i64: 8, 384>}, {pipeline_mode = #tpu.pipeline_mode<synchronous>, transform_indices = @transform_6, window_bounds = array<i64: 8, 1>}, {transform_indices = @transform_7, window_bounds = array<i64: 8, 128>}]} {
    %c0 = arith.constant 0 : index
    %c0_0 = arith.constant 0 : index
    %0 = vector.load %arg1[%c0, %c0_0] : memref<1x128xf32, #tpu.memory_space<vmem>>, vector<1x128xf32>
    %1 = vector.shape_cast %0 : vector<1x128xf32> to vector<1x128xf32>
    %2 = vector.broadcast %1 : vector<1x128xf32> to vector<8x128xf32>
    %3 = tpu.transpose %2, [1, 0] : vector<8x128xf32> -> vector<128x8xf32>
    %4 = vector.extract_strided_slice %3 {offsets = [0, 0], sizes = [128, 1], strides = [1, 1]} : vector<128x8xf32> to vector<128x1xf32>
    %c0_1 = arith.constant 0 : index
    %c0_2 = arith.constant 0 : index
    %5 = vector.load %arg2[%c0_1, %c0_2] : memref<1x1024xf32, #tpu.memory_space<vmem>>, vector<1x1024xf32>
    %6 = vector.broadcast %4 : vector<128x1xf32> to vector<128x1024xf32>
    %7 = vector.broadcast %5 : vector<1x1024xf32> to vector<128x1024xf32>
    %8 = arith.mulf %6, %7 : vector<128x1024xf32>
    %c0_3 = arith.constant 0 : index
    %c0_4 = arith.constant 0 : index
    %9 = vector.load %arg3[%c0_3, %c0_4] : memref<1x1024xf32, #tpu.memory_space<vmem>>, vector<1x1024xf32>
    %10 = vector.broadcast %9 : vector<1x1024xf32> to vector<128x1024xf32>
    %11 = arith.addf %8, %10 : vector<128x1024xf32>
    %cst = arith.constant 0.000000e+00 : f32
    %12 = vector.broadcast %cst : f32 to vector<128x1024xf32>
    %13 = arith.maximumf %11, %12 : vector<128x1024xf32>
    %14 = arith.truncf %13 : vector<128x1024xf32> to vector<128x1024xbf16>
    %c0_5 = arith.constant 0 : index
    %c0_6 = arith.constant 0 : index
    %15 = vector.load %arg4[%c0_5, %c0_6] : memref<1024x384xbf16, #tpu.memory_space<vmem>>, vector<1024x384xbf16>
    %cst_7 = arith.constant dense<0.000000e+00> : vector<128x384xf32>
    %16 = tpu.matmul %14, %15, %cst_7 {dimension_numbers = #tpu.dot_dimension_numbers<[1], [0], [0], [1], [0, 0, 1, 1], [], []>} : vector<128x1024xbf16>, vector<1024x384xbf16>, vector<128x384xf32> -> vector<128x384xf32>
    %c0_8 = arith.constant 0 : index
    %c0_9 = arith.constant 0 : index
    %17 = vector.load %arg5[%c0_8, %c0_9] : memref<1x384xf32, #tpu.memory_space<vmem>>, vector<1x384xf32>
    %18 = vector.broadcast %17 : vector<1x384xf32> to vector<128x384xf32>
    %19 = arith.addf %16, %18 : vector<128x384xf32>
    %cst_10 = arith.constant 0.000000e+00 : f32
    %20 = vector.broadcast %cst_10 : f32 to vector<128x384xf32>
    %21 = arith.maximumf %19, %20 : vector<128x384xf32>
    %c0_11 = arith.constant 0 : index
    %c0_12 = arith.constant 0 : index
    %22 = vector.load %arg6[%c0_11, %c0_12] : memref<8x384xbf16, #tpu.memory_space<vmem>>, vector<8x384xbf16>
    %23 = arith.truncf %21 : vector<128x384xf32> to vector<128x384xbf16>
    %cst_13 = arith.constant dense<0.000000e+00> : vector<8x128xf32>
    %24 = tpu.matmul %22, %23, %cst_13 {dimension_numbers = #tpu.dot_dimension_numbers<[1], [1], [0], [0], [0, 0, 1, 0], [], []>} : vector<8x384xbf16>, vector<128x384xbf16>, vector<8x128xf32> -> vector<8x128xf32>
    %c0_14 = arith.constant 0 : index
    %c0_15 = arith.constant 0 : index
    %25 = vector.load %arg7[%c0_14, %c0_15] : memref<8x1xf32, #tpu.memory_space<vmem>>, vector<8x1xf32>
    %26 = vector.broadcast %25 : vector<8x1xf32> to vector<8x128xf32>
    %27 = arith.addf %24, %26 : vector<8x128xf32>
    %28 = tpu.iota {dimensions = array<i32: 0>} : vector<8x128xi32>
    %cst_16 = arith.constant -2.000000e+01 : f32
    %cst_17 = arith.constant 2.000000e+00 : f32
    %29 = vector.broadcast %cst_16 : f32 to vector<8x128xf32>
    %30 = arith.maximumf %29, %27 : vector<8x128xf32>
    %31 = vector.broadcast %cst_17 : f32 to vector<8x128xf32>
    %32 = arith.minimumf %31, %30 : vector<8x128xf32>
    %33 = math.exp %32 : vector<8x128xf32>
    %c4_i32 = arith.constant 4 : i32
    %34 = vector.broadcast %c4_i32 : i32 to vector<8x128xi32>
    %35 = arith.cmpi sge, %28, %34 : vector<8x128xi32>
    %36 = arith.select %35, %33, %27 : vector<8x128xi1>, vector<8x128xf32>
    %c0_18 = arith.constant 0 : index
    %c0_19 = arith.constant 0 : index
    %37 = vector.load %arg8[%c0_18, %c0_19] : memref<8x128xf32, #tpu.memory_space<vmem>>, vector<8x128xf32>
    tpu.vector_store %arg8[%c0_18, %c0_19], %36 {strides = array<i32>} : memref<8x128xf32, #tpu.memory_space<vmem>>, vector<8x128xf32>,
    return
  }
  func.func @transform_0(%arg0: i32) -> (i32, i32) {
    %c0_i32 = arith.constant 0 : i32
    %c0_i32_0 = arith.constant 0 : i32
    return %c0_i32, %arg0 : i32, i32
  }
  func.func @transform_1(%arg0: i32) -> (i32, i32) {
    %c0_i32 = arith.constant 0 : i32
    %c0_i32_0 = arith.constant 0 : i32
    %c0_i32_1 = arith.constant 0 : i32
    return %c0_i32, %c0_i32_0 : i32, i32
  }
  func.func @transform_2(%arg0: i32) -> (i32, i32) {
    %c0_i32 = arith.constant 0 : i32
    %c0_i32_0 = arith.constant 0 : i32
    %c0_i32_1 = arith.constant 0 : i32
    return %c0_i32, %c0_i32_0 : i32, i32
  }
  func.func @transform_3(%arg0: i32) -> (i32, i32) {
    %c0_i32 = arith.constant 0 : i32
    %c0_i32_0 = arith.constant 0 : i32
    %c0_i32_1 = arith.constant 0 : i32
    return %c0_i32, %c0_i32_0 : i32, i32
  }
  func.func @transform_4(%arg0: i32) -> (i32, i32) {
    %c0_i32 = arith.constant 0 : i32
    %c0_i32_0 = arith.constant 0 : i32
    %c0_i32_1 = arith.constant 0 : i32
    return %c0_i32, %c0_i32_0 : i32, i32
  }
  func.func @transform_5(%arg0: i32) -> (i32, i32) {
    %c0_i32 = arith.constant 0 : i32
    %c0_i32_0 = arith.constant 0 : i32
    %c0_i32_1 = arith.constant 0 : i32
    return %c0_i32, %c0_i32_0 : i32, i32
  }
  func.func @transform_6(%arg0: i32) -> (i32, i32) {
    %c0_i32 = arith.constant 0 : i32
    %c0_i32_0 = arith.constant 0 : i32
    %c0_i32_1 = arith.constant 0 : i32
    return %c0_i32, %c0_i32_0 : i32, i32
  }
  func.func @transform_7(%arg0: i32) -> (i32, i32) {
    %c0_i32 = arith.constant 0 : i32
    %c0_i32_0 = arith.constant 0 : i32
    return %c0_i32, %arg0 : i32, i32
  }
}

</mosaic_0001>

<llo_original>
// kernel: tpu_custom_call.1
$region0: #{tpu_custom_call.1}
  #allocation0 [shape = 'u32[]', space=smem, size = 0x4, offset = 0x4, fixed_abs, tag = 'smem constant byte address 0x4 - core index']
  #allocation1 [shape = 'u32[72,128]{1,0:T(1,128)}', space=vmem, size = 0x9000, scoped, tag = 'internal scratch']
  %s0 = inlined_call_operand.vmem [shape: f32[1,128], index: 0, kind: input, shape index: {}]
  %s1 = inlined_call_operand.vmem [shape: f32[1,1024], index: 1, kind: input, shape index: {}]
  %s2 = inlined_call_operand.hbm [shape: f32[1,1024], index: 2, kind: input, shape index: {}]
  %s3 = inlined_call_operand.hbm [shape: bf16[1024,384], index: 3, kind: input, shape index: {}]
  %s4 = inlined_call_operand.hbm [shape: f32[1,384], index: 4, kind: input, shape index: {}]
  %s5 = inlined_call_operand.hbm [shape: bf16[8,384], index: 5, kind: input, shape index: {}]
  %s6 = inlined_call_operand.vmem [shape: f32[8,1], index: 6, kind: input, shape index: {}]
  %s7 = inlined_call_operand.hbm [shape: f32[8,128], index: 7, kind: output, shape index: {}]
  %s8 = sld [smem:[#allocation0]]
  $region54: #{tpu_custom_call.1} parent=0
    _
  %s10 = ssub.s32 1, %s8
  %s11 = scalar_select 0, %s10, %s8
  $region1: #{tpu_custom_call.1} parent=0
    #allocation2 [shape = 'u8[4096]{0}', space=vmem, size = 0x1000, scoped, tag = 'input window, operand 2, single buffered']
    #allocation3 [shape = 's32[1]{0}', space=sflag, size = 0x4, scoped, tag = 'scoped memory for tpu_custom_call.1']
    #allocation4 [shape = 's32[1]{0}', space=sflag, size = 0x4, scoped, tag = 'scoped memory for tpu_custom_call.1']
    #allocation5 [shape = 'u8[786432]{0}', space=vmem, size = 0xc0000, scoped, tag = 'input window, operand 3, single buffered']
    #allocation6 [shape = 's32[1]{0}', space=sflag, size = 0x4, scoped, tag = 'scoped memory for tpu_custom_call.1']
    #allocation7 [shape = 'u8[1536]{0}', space=vmem, size = 0x800, scoped, tag = 'input window, operand 4, single buffered']
    #allocation8 [shape = 'u8[6144]{0}', space=vmem, size = 0x1800, scoped, tag = 'input window, operand 5, single buffered']
    #allocation9 [shape = 's32[1]{0}', space=sflag, size = 0x4, scoped, tag = 'scoped memory for tpu_custom_call.1']
    #allocation10 [shape = 'u8[4096]{0}', space=vmem, size = 0x1000, scoped, tag = 'output window, operand 0, single buffered']
    %12 = vsyncpa [#allocation3], 0
    %13 = vsyncpa [#allocation6], 0
    %14 = vsyncpa [#allocation9], 0
    %15 = vsyncpa [#allocation4], 0
    // Predicated region
    $region2: #{tpu_custom_call.1} parent=1 // pred_check
      _
    $region3: #{tpu_custom_call.1} parent=1 // pred_check_branch
      %17 = sbr.rel (0) target = $region5
    $region4: #{tpu_custom_call.1} parent=1 // pred_region
      _
    $region5: #{tpu_custom_call.1} parent=1 // pred_fallthru
      _
    // Predicated region
    $region6: #{tpu_custom_call.1} parent=1 // pred_check
      _
    $region7: #{tpu_custom_call.1} parent=1 // pred_check_branch
      %19 = sbr.rel (0) target = $region9
    $region8: #{tpu_custom_call.1} parent=1 // pred_region
      _
    $region9: #{tpu_custom_call.1} parent=1 // pred_fallthru
      _
    // Predicated region
    $region10: #{tpu_custom_call.1} parent=1 // pred_check
      _
    $region11: #{tpu_custom_call.1} parent=1 // pred_check_branch
      %21 = sbr.rel (0) target = $region13
    $region12: #{tpu_custom_call.1} parent=1 // pred_region
      %23 = vsyncadd [#allocation3], 0
      %s25 = sshll.u32 %s2, 4
      %s26 = int_to_ptr.hbm [resolvable:$true] %s25
      %s27 = sshll.u32 [#allocation2], 4
      %s28 = int_to_ptr.vmem [resolvable:$true] %s27
      %30 = dma.hbm_to_vmem [thread:$0]  %s26, 128, %s28, [#allocation3]
    $region13: #{tpu_custom_call.1} parent=1 // pred_fallthru
      _
    // Predicated region
    $region14: #{tpu_custom_call.1} parent=1 // pred_check
      _
    $region15: #{tpu_custom_call.1} parent=1 // pred_check_branch
      %32 = sbr.rel (0) target = $region17
    $region16: #{tpu_custom_call.1} parent=1 // pred_region
      %34 = vsyncadd [#allocation6], 0
      %s35 = sshll.u32 %s3, 4
      %s36 = int_to_ptr.hbm [resolvable:$true] %s35
      %s37 = sshll.u32 [#allocation5], 4
      %s38 = int_to_ptr.vmem [resolvable:$true] %s37
      %43 = dma.hbm_to_vmem [thread:$0]  %s36, 24576, %s38, [#allocation6], 192, 192, 12
    $region17: #{tpu_custom_call.1} parent=1 // pred_fallthru
      _
    // Predicated region
    $region18: #{tpu_custom_call.1} parent=1 // pred_check
      _
    $region19: #{tpu_custom_call.1} parent=1 // pred_check_branch
      %45 = sbr.rel (0) target = $region21
    $region20: #{tpu_custom_call.1} parent=1 // pred_region
      %47 = vsyncadd [#allocation6], 0
      %s49 = sshll.u32 %s4, 4
      %s50 = int_to_ptr.hbm [resolvable:$true] %s49
      %s51 = sshll.u32 [#allocation7], 4
      %s52 = int_to_ptr.vmem [resolvable:$true] %s51
      %54 = dma.hbm_to_vmem [thread:$0]  %s50, 48, %s52, [#allocation6]
    $region21: #{tpu_custom_call.1} parent=1 // pred_fallthru
      _
    // Predicated region
    $region22: #{tpu_custom_call.1} parent=1 // pred_check
      _
    $region23: #{tpu_custom_call.1} parent=1 // pred_check_branch
      %56 = sbr.rel (0) target = $region25
    $region24: #{tpu_custom_call.1} parent=1 // pred_region
      %58 = vsyncadd [#allocation9], 0
      %s60 = sshll.u32 %s5, 4
      %s61 = int_to_ptr.hbm [resolvable:$true] %s60
      %s62 = sshll.u32 [#allocation8], 4
      %s63 = int_to_ptr.vmem [resolvable:$true] %s62
      %65 = dma.hbm_to_vmem [thread:$0]  %s61, 192, %s63, [#allocation9]
    $region25: #{tpu_custom_call.1} parent=1 // pred_fallthru
      _
    // Predicated region
    $region26: #{tpu_custom_call.1} parent=1 // pred_check
      _
    $region27: #{tpu_custom_call.1} parent=1 // pred_check_branch
      %67 = sbr.rel (0) target = $region29
    $region28: #{tpu_custom_call.1} parent=1 // pred_region
      _
    $region29: #{tpu_custom_call.1} parent=1 // pred_fallthru
      _
    // Predicated region
    $region30: #{tpu_custom_call.1} parent=1 // pred_check
      _
    $region31: #{tpu_custom_call.1} parent=1 // pred_check_branch
      %69 = sbr.rel (0) target = $region33
    $region32: #{tpu_custom_call.1} parent=1 // pred_region
      %71 = dma.done [#allocation3], 128
    $region33: #{tpu_custom_call.1} parent=1 // pred_fallthru
      _
    // Predicated region
    $region34: #{tpu_custom_call.1} parent=1 // pred_check
      _
    $region35: #{tpu_custom_call.1} parent=1 // pred_check_branch
      %73 = sbr.rel (0) target = $region37
    $region36: #{tpu_custom_call.1} parent=1 // pred_region
      %75 = dma.done [#allocation6], 24576
    $region37: #{tpu_custom_call.1} parent=1 // pred_fallthru
      _
    // Predicated region
    $region38: #{tpu_custom_call.1} parent=1 // pred_check
      _
    $region39: #{tpu_custom_call.1} parent=1 // pred_check_branch
      %77 = sbr.rel (0) target = $region41
    $region40: #{tpu_custom_call.1} parent=1 // pred_region
      %79 = dma.done [#allocation6], 48
    $region41: #{tpu_custom_call.1} parent=1 // pred_fallthru
      _
    // Predicated region
    $region42: #{tpu_custom_call.1} parent=1 // pred_check
      _
    $region43: #{tpu_custom_call.1} parent=1 // pred_check_branch
      %81 = sbr.rel (0) target = $region45
    $region44: #{tpu_custom_call.1} parent=1 // pred_region
      %83 = dma.done [#allocation9], 192
    $region45: #{tpu_custom_call.1} parent=1 // pred_fallthru
      _
    %v84 = vld [vmem:[%s0] sm:$0x1]
    %v86 = vperm.slane %v84, 0
    %88 = vxpose.xlu0.b32.start [1/16] %v86, 128
    %89 = vxpose.xlu0.b32.cont [2/16] 0.0, 128
    %90 = vxpose.xlu0.b32.cont [3/16] 0.0, 128
    %91 = vxpose.xlu0.b32.cont [4/16] 0.0, 128
    %92 = vxpose.xlu0.b32.cont [5/16] 0.0, 128
    %93 = vxpose.xlu0.b32.cont [6/16] 0.0, 128
    %94 = vxpose.xlu0.b32.cont [7/16] 0.0, 128
    %95 = vxpose.xlu0.b32.cont [8/16] 0.0, 128
    %96 = vxpose.xlu0.b32.cont [9/16] 0.0, 128
    %97 = vxpose.xlu0.b32.cont [10/16] 0.0, 128
    %98 = vxpose.xlu0.b32.cont [11/16] 0.0, 128
    %99 = vxpose.xlu0.b32.cont [12/16] 0.0, 128
    %100 = vxpose.xlu0.b32.cont [13/16] 0.0, 128
    %101 = vxpose.xlu0.b32.cont [14/16] 0.0, 128
    %102 = vxpose.xlu0.b32.cont [15/16] 0.0, 128
    %103 = vxpose.xlu0.b32.end [16/16] 0.0, 128
    %v104 = vpop.trf.xlu0
    %v105 = vpop.trf.xlu0
    %v106 = vpop.trf.xlu0
    %v107 = vpop.trf.xlu0
    %v108 = vpop.trf.xlu0
    %v109 = vpop.trf.xlu0
    %v110 = vpop.trf.xlu0
    %v111 = vpop.trf.xlu0
    %v112 = vpop.trf.xlu0
    %v113 = vpop.trf.xlu0
    %v114 = vpop.trf.xlu0
    %v115 = vpop.trf.xlu0
    %v116 = vpop.trf.xlu0
    %v117 = vpop.trf.xlu0
    %v118 = vpop.trf.xlu0
    %v119 = vpop.trf.xlu0
    %v120 = vld [vmem:[%s1] sm:$0xff]
    %122 = vset.pattern.permute.xlu0 0
    %123 = vperm.xlu0 %122, %v104
    %v124 = vpop.permute.xlu0 %123
    %127 = vset.pattern.permute.xlu0 0
    %128 = vperm.xlu0 %127, %v105
    %v129 = vpop.permute.xlu0 %128
    %132 = vset.pattern.permute.xlu0 0
    %133 = vperm.xlu0 %132, %v106
    %v134 = vpop.permute.xlu0 %133
    %137 = vset.pattern.permute.xlu0 0
    %138 = vperm.xlu0 %137, %v107
    %v139 = vpop.permute.xlu0 %138
    %142 = vset.pattern.permute.xlu0 0
    %143 = vperm.xlu0 %142, %v108
    %v144 = vpop.permute.xlu0 %143
    %147 = vset.pattern.permute.xlu0 0
    %148 = vperm.xlu0 %147, %v109
    %v149 = vpop.permute.xlu0 %148
    %152 = vset.pattern.permute.xlu0 0
    %153 = vperm.xlu0 %152, %v110
    %v154 = vpop.permute.xlu0 %153
    %157 = vset.pattern.permute.xlu0 0
    %158 = vperm.xlu0 %157, %v111
    %v159 = vpop.permute.xlu0 %158
    %162 = vset.pattern.permute.xlu0 0
    %163 = vperm.xlu0 %162, %v112
    %v164 = vpop.permute.xlu0 %163
    %167 = vset.pattern.permute.xlu0 0
    %168 = vperm.xlu0 %167, %v113
    %v169 = vpop.permute.xlu0 %168
    %172 = vset.pattern.permute.xlu0 0
    %173 = vperm.xlu0 %172, %v114
    %v174 = vpop.permute.xlu0 %173
    %177 = vset.pattern.permute.xlu0 0
    %178 = vperm.xlu0 %177, %v115
    %v179 = vpop.permute.xlu0 %178
    %182 = vset.pattern.permute.xlu0 0
    %183 = vperm.xlu0 %182, %v116
    %v184 = vpop.permute.xlu0 %183
    %187 = vset.pattern.permute.xlu0 0
    %188 = vperm.xlu0 %187, %v117
    %v189 = vpop.permute.xlu0 %188
    %192 = vset.pattern.permute.xlu0 0
    %193 = vperm.xlu0 %192, %v118
    %v194 = vpop.permute.xlu0 %193
    %197 = vset.pattern.permute.xlu0 0
    %198 = vperm.xlu0 %197, %v119
    %v199 = vpop.permute.xlu0 %198
    %v202 = vperm.slane %v120, 0
    %v203 = vperm.slane %v120, 1
    %v204 = vperm.slane %v120, 2
    %v205 = vperm.slane %v120, 3
    %v206 = vperm.slane %v120, 4
    %v207 = vperm.slane %v120, 5
    %v208 = vperm.slane %v120, 6
    %v209 = vperm.slane %v120, 7
    %v218 = vmul.f32 %v124, %v202
    %v219 = vmul.f32 %v124, %v203
    %v220 = vmul.f32 %v124, %v204
    %v221 = vmul.f32 %v124, %v205
    %v222 = vmul.f32 %v124, %v206
    %v223 = vmul.f32 %v124, %v207
    %v224 = vmul.f32 %v124, %v208
    %v225 = vmul.f32 %v124, %v209
    %v226 = vmul.f32 %v129, %v202
    %v227 = vmul.f32 %v129, %v203
    %v228 = vmul.f32 %v129, %v204
    %v229 = vmul.f32 %v129, %v205
    %v230 = vmul.f32 %v129, %v206
    %v231 = vmul.f32 %v129, %v207
    %v232 = vmul.f32 %v129, %v208
    %v233 = vmul.f32 %v129, %v209
    %v234 = vmul.f32 %v134, %v202
    %v235 = vmul.f32 %v134, %v203
    %v236 = vmul.f32 %v134, %v204
    %v237 = vmul.f32 %v134, %v205
    %v238 = vmul.f32 %v134, %v206
    %v239 = vmul.f32 %v134, %v207
    %v240 = vmul.f32 %v134, %v208
    %v241 = vmul.f32 %v134, %v209
    %v242 = vmul.f32 %v139, %v202
    %v243 = vmul.f32 %v139, %v203
    %v244 = vmul.f32 %v139, %v204
    %v245 = vmul.f32 %v139, %v205
    %v246 = vmul.f32 %v139, %v206
    %v247 = vmul.f32 %v139, %v207
    %v248 = vmul.f32 %v139, %v208
    %v249 = vmul.f32 %v139, %v209
    %v250 = vmul.f32 %v144, %v202
    %v251 = vmul.f32 %v144, %v203
    %v252 = vmul.f32 %v144, %v204
    %v253 = vmul.f32 %v144, %v205
    %v254 = vmul.f32 %v144, %v206
    %v255 = vmul.f32 %v144, %v207
    %v256 = vmul.f32 %v144, %v208
    %v257 = vmul.f32 %v144, %v209
    %v258 = vmul.f32 %v149, %v202
    %v259 = vmul.f32 %v149, %v203
    %v260 = vmul.f32 %v149, %v204
    %v261 = vmul.f32 %v149, %v205
    %v262 = vmul.f32 %v149, %v206
    %v263 = vmul.f32 %v149, %v207
    %v264 = vmul.f32 %v149, %v208
    %v265 = vmul.f32 %v149, %v209
    %v266 = vmul.f32 %v154, %v202
    %v267 = vmul.f32 %v154, %v203
    %v268 = vmul.f32 %v154, %v204
    %v269 = vmul.f32 %v154, %v205
    %v270 = vmul.f32 %v154, %v206
    %v271 = vmul.f32 %v154, %v207
    %v272 = vmul.f32 %v154, %v208
    %v273 = vmul.f32 %v154, %v209
    %v274 = vmul.f32 %v159, %v202
    %v275 = vmul.f32 %v159, %v203
    %v276 = vmul.f32 %v159, %v204
    %v277 = vmul.f32 %v159, %v205
    %v278 = vmul.f32 %v159, %v206
    %v279 = vmul.f32 %v159, %v207
    %v280 = vmul.f32 %v159, %v208
    %v281 = vmul.f32 %v159, %v209
    %v282 = vmul.f32 %v164, %v202
    %v283 = vmul.f32 %v164, %v203
    %v284 = vmul.f32 %v164, %v204
    %v285 = vmul.f32 %v164, %v205
    %v286 = vmul.f32 %v164, %v206
    %v287 = vmul.f32 %v164, %v207
    %v288 = vmul.f32 %v164, %v208
    %v289 = vmul.f32 %v164, %v209
    %v290 = vmul.f32 %v169, %v202
    %v291 = vmul.f32 %v169, %v203
    %v292 = vmul.f32 %v169, %v204
    %v293 = vmul.f32 %v169, %v205
    %v294 = vmul.f32 %v169, %v206
    %v295 = vmul.f32 %v169, %v207
    %v296 = vmul.f32 %v169, %v208
    %v297 = vmul.f32 %v169, %v209
    %v298 = vmul.f32 %v174, %v202
    %v299 = vmul.f32 %v174, %v203
    %v300 = vmul.f32 %v174, %v204
    %v301 = vmul.f32 %v174, %v205
    %v302 = vmul.f32 %v174, %v206
    %v303 = vmul.f32 %v174, %v207
    %v304 = vmul.f32 %v174, %v208
    %v305 = vmul.f32 %v174, %v209
    %v306 = vmul.f32 %v179, %v202
    %v307 = vmul.f32 %v179, %v203
    %v308 = vmul.f32 %v179, %v204
    %v309 = vmul.f32 %v179, %v205
    %v310 = vmul.f32 %v179, %v206
    %v311 = vmul.f32 %v179, %v207
    %v312 = vmul.f32 %v179, %v208
    %v313 = vmul.f32 %v179, %v209
    %v314 = vmul.f32 %v184, %v202
    %v315 = vmul.f32 %v184, %v203
    %v316 = vmul.f32 %v184, %v204
    %v317 = vmul.f32 %v184, %v205
    %v318 = vmul.f32 %v184, %v206
    %v319 = vmul.f32 %v184, %v207
    %v320 = vmul.f32 %v184, %v208
    %v321 = vmul.f32 %v184, %v209
    %v322 = vmul.f32 %v189, %v202
    %v323 = vmul.f32 %v189, %v203
    %v324 = vmul.f32 %v189, %v204
    %v325 = vmul.f32 %v189, %v205
    %v326 = vmul.f32 %v189, %v206
    %v327 = vmul.f32 %v189, %v207
    %v328 = vmul.f32 %v189, %v208
    %v329 = vmul.f32 %v189, %v209
    %v330 = vmul.f32 %v194, %v202
    %v331 = vmul.f32 %v194, %v203
    %v332 = vmul.f32 %v194, %v204
    %v333 = vmul.f32 %v194, %v205
    %v334 = vmul.f32 %v194, %v206
    %v335 = vmul.f32 %v194, %v207
    %v336 = vmul.f32 %v194, %v208
    %v337 = vmul.f32 %v194, %v209
    %v338 = vmul.f32 %v199, %v202
    %v339 = vmul.f32 %v199, %v203
    %v340 = vmul.f32 %v199, %v204
    %v341 = vmul.f32 %v199, %v205
    %v342 = vmul.f32 %v199, %v206
    %v343 = vmul.f32 %v199, %v207
    %v344 = vmul.f32 %v199, %v208
    %v345 = vmul.f32 %v199, %v209
    %v346 = vld [vmem:[#allocation2] sm:$0xff]
    %v348 = vperm.slane %v346, 0
    %v349 = vperm.slane %v346, 1
    %v350 = vperm.slane %v346, 2
    %v351 = vperm.slane %v346, 3
    %v352 = vperm.slane %v346, 4
    %v353 = vperm.slane %v346, 5
    %v354 = vperm.slane %v346, 6
    %v355 = vperm.slane %v346, 7
    %v364 = vadd.f32 %v218, %v348
    %v365 = vadd.f32 %v219, %v349
    %v366 = vadd.f32 %v220, %v350
    %v367 = vadd.f32 %v221, %v351
    %v368 = vadd.f32 %v222, %v352
    %v369 = vadd.f32 %v223, %v353
    %v370 = vadd.f32 %v224, %v354
    %v371 = vadd.f32 %v225, %v355
    %v372 = vadd.f32 %v226, %v348
    %v373 = vadd.f32 %v227, %v349
    %v374 = vadd.f32 %v228, %v350
    %v375 = vadd.f32 %v229, %v351
    %v376 = vadd.f32 %v230, %v352
    %v377 = vadd.f32 %v231, %v353
    %v378 = vadd.f32 %v232, %v354
    %v379 = vadd.f32 %v233, %v355
    %v380 = vadd.f32 %v234, %v348
    %v381 = vadd.f32 %v235, %v349
    %v382 = vadd.f32 %v236, %v350
    %v383 = vadd.f32 %v237, %v351
    %v384 = vadd.f32 %v238, %v352
    %v385 = vadd.f32 %v239, %v353
    %v386 = vadd.f32 %v240, %v354
    %v387 = vadd.f32 %v241, %v355
    %v388 = vadd.f32 %v242, %v348
    %v389 = vadd.f32 %v243, %v349
    %v390 = vadd.f32 %v244, %v350
    %v391 = vadd.f32 %v245, %v351
    %v392 = vadd.f32 %v246, %v352
    %v393 = vadd.f32 %v247, %v353
    %v394 = vadd.f32 %v248, %v354
    %v395 = vadd.f32 %v249, %v355
    %v396 = vadd.f32 %v250, %v348
    %v397 = vadd.f32 %v251, %v349
    %v398 = vadd.f32 %v252, %v350
    %v399 = vadd.f32 %v253, %v351
    %v400 = vadd.f32 %v254, %v352
    %v401 = vadd.f32 %v255, %v353
    %v402 = vadd.f32 %v256, %v354
    %v403 = vadd.f32 %v257, %v355
    %v404 = vadd.f32 %v258, %v348
    %v405 = vadd.f32 %v259, %v349
    %v406 = vadd.f32 %v260, %v350
    %v407 = vadd.f32 %v261, %v351
    %v408 = vadd.f32 %v262, %v352
    %v409 = vadd.f32 %v263, %v353
    %v410 = vadd.f32 %v264, %v354
    %v411 = vadd.f32 %v265, %v355
    %v412 = vadd.f32 %v266, %v348
    %v413 = vadd.f32 %v267, %v349
    %v414 = vadd.f32 %v268, %v350
    %v415 = vadd.f32 %v269, %v351
    %v416 = vadd.f32 %v270, %v352
    %v417 = vadd.f32 %v271, %v353
    %v418 = vadd.f32 %v272, %v354
    %v419 = vadd.f32 %v273, %v355
    %v420 = vadd.f32 %v274, %v348
    %v421 = vadd.f32 %v275, %v349
    %v422 = vadd.f32 %v276, %v350
    %v423 = vadd.f32 %v277, %v351
    %v424 = vadd.f32 %v278, %v352
    %v425 = vadd.f32 %v279, %v353
    %v426 = vadd.f32 %v280, %v354
    %v427 = vadd.f32 %v281, %v355
    %v428 = vadd.f32 %v282, %v348
    %v429 = vadd.f32 %v283, %v349
    %v430 = vadd.f32 %v284, %v350
    %v431 = vadd.f32 %v285, %v351
    %v432 = vadd.f32 %v286, %v352
    %v433 = vadd.f32 %v287, %v353
    %v434 = vadd.f32 %v288, %v354
    %v435 = vadd.f32 %v289, %v355
    %v436 = vadd.f32 %v290, %v348
    %v437 = vadd.f32 %v291, %v349
    %v438 = vadd.f32 %v292, %v350
    %v439 = vadd.f32 %v293, %v351
    %v440 = vadd.f32 %v294, %v352
    %v441 = vadd.f32 %v295, %v353
    %v442 = vadd.f32 %v296, %v354
    %v443 = vadd.f32 %v297, %v355
    %v444 = vadd.f32 %v298, %v348
    %v445 = vadd.f32 %v299, %v349
    %v446 = vadd.f32 %v300, %v350
    %v447 = vadd.f32 %v301, %v351
    %v448 = vadd.f32 %v302, %v352
    %v449 = vadd.f32 %v303, %v353
    %v450 = vadd.f32 %v304, %v354
    %v451 = vadd.f32 %v305, %v355
    %v452 = vadd.f32 %v306, %v348
    %v453 = vadd.f32 %v307, %v349
    %v454 = vadd.f32 %v308, %v350
    %v455 = vadd.f32 %v309, %v351
    %v456 = vadd.f32 %v310, %v352
    %v457 = vadd.f32 %v311, %v353
    %v458 = vadd.f32 %v312, %v354
    %v459 = vadd.f32 %v313, %v355
    %v460 = vadd.f32 %v314, %v348
    %v461 = vadd.f32 %v315, %v349
    %v462 = vadd.f32 %v316, %v350
    %v463 = vadd.f32 %v317, %v351
    %v464 = vadd.f32 %v318, %v352
    %v465 = vadd.f32 %v319, %v353
    %v466 = vadd.f32 %v320, %v354
    %v467 = vadd.f32 %v321, %v355
    %v468 = vadd.f32 %v322, %v348
    %v469 = vadd.f32 %v323, %v349
    %v470 = vadd.f32 %v324, %v350
    %v471 = vadd.f32 %v325, %v351
    %v472 = vadd.f32 %v326, %v352
    %v473 = vadd.f32 %v327, %v353
    %v474 = vadd.f32 %v328, %v354
    %v475 = vadd.f32 %v329, %v355
    %v476 = vadd.f32 %v330, %v348
    %v477 = vadd.f32 %v331, %v349
    %v478 = vadd.f32 %v332, %v350
    %v479 = vadd.f32 %v333, %v351
    %v480 = vadd.f32 %v334, %v352
    %v481 = vadd.f32 %v335, %v353
    %v482 = vadd.f32 %v336, %v354
    %v483 = vadd.f32 %v337, %v355
    %v484 = vadd.f32 %v338, %v348
    %v485 = vadd.f32 %v339, %v349
    %v486 = vadd.f32 %v340, %v350
    %v487 = vadd.f32 %v341, %v351
    %v488 = vadd.f32 %v342, %v352
    %v489 = vadd.f32 %v343, %v353
    %v490 = vadd.f32 %v344, %v354
    %v491 = vadd.f32 %v345, %v355
    %v492 = vmax.f32 %v364, 0.0
    %v493 = vmax.f32 %v365, 0.0
    %v494 = vmax.f32 %v366, 0.0
    %v495 = vmax.f32 %v367, 0.0
    %v496 = vmax.f32 %v368, 0.0
    %v497 = vmax.f32 %v369, 0.0
    %v498 = vmax.f32 %v370, 0.0
    %v499 = vmax.f32 %v371, 0.0
    %v500 = vmax.f32 %v372, 0.0
    %v501 = vmax.f32 %v373, 0.0
    %v502 = vmax.f32 %v374, 0.0
    %v503 = vmax.f32 %v375, 0.0
    %v504 = vmax.f32 %v376, 0.0
    %v505 = vmax.f32 %v377, 0.0
    %v506 = vmax.f32 %v378, 0.0
    %v507 = vmax.f32 %v379, 0.0
    %v508 = vmax.f32 %v380, 0.0
    %v509 = vmax.f32 %v381, 0.0
    %v510 = vmax.f32 %v382, 0.0
    %v511 = vmax.f32 %v383, 0.0
    %v512 = vmax.f32 %v384, 0.0
    %v513 = vmax.f32 %v385, 0.0
    %v514 = vmax.f32 %v386, 0.0
    %v515 = vmax.f32 %v387, 0.0
    %v516 = vmax.f32 %v388, 0.0
    %v517 = vmax.f32 %v389, 0.0
    %v518 = vmax.f32 %v390, 0.0
    %v519 = vmax.f32 %v391, 0.0
    %v520 = vmax.f32 %v392, 0.0
    %v521 = vmax.f32 %v393, 0.0
    %v522 = vmax.f32 %v394, 0.0
    %v523 = vmax.f32 %v395, 0.0
    %v524 = vmax.f32 %v396, 0.0
    %v525 = vmax.f32 %v397, 0.0
    %v526 = vmax.f32 %v398, 0.0
    %v527 = vmax.f32 %v399, 0.0
    %v528 = vmax.f32 %v400, 0.0
    %v529 = vmax.f32 %v401, 0.0
    %v530 = vmax.f32 %v402, 0.0
    %v531 = vmax.f32 %v403, 0.0
    %v532 = vmax.f32 %v404, 0.0
    %v533 = vmax.f32 %v405, 0.0
    %v534 = vmax.f32 %v406, 0.0
    %v535 = vmax.f32 %v407, 0.0
    %v536 = vmax.f32 %v408, 0.0
    %v537 = vmax.f32 %v409, 0.0
    %v538 = vmax.f32 %v410, 0.0
    %v539 = vmax.f32 %v411, 0.0
    %v540 = vmax.f32 %v412, 0.0
    %v541 = vmax.f32 %v413, 0.0
    %v542 = vmax.f32 %v414, 0.0
    %v543 = vmax.f32 %v415, 0.0
    %v544 = vmax.f32 %v416, 0.0
    %v545 = vmax.f32 %v417, 0.0
    %v546 = vmax.f32 %v418, 0.0
    %v547 = vmax.f32 %v419, 0.0
    %v548 = vmax.f32 %v420, 0.0
    %v549 = vmax.f32 %v421, 0.0
    %v550 = vmax.f32 %v422, 0.0
    %v551 = vmax.f32 %v423, 0.0
    %v552 = vmax.f32 %v424, 0.0
    %v553 = vmax.f32 %v425, 0.0
    %v554 = vmax.f32 %v426, 0.0
    %v555 = vmax.f32 %v427, 0.0
    %v556 = vmax.f32 %v428, 0.0
    %v557 = vmax.f32 %v429, 0.0
    %v558 = vmax.f32 %v430, 0.0
    %v559 = vmax.f32 %v431, 0.0
    %v560 = vmax.f32 %v432, 0.0
    %v561 = vmax.f32 %v433, 0.0
    %v562 = vmax.f32 %v434, 0.0
    %v563 = vmax.f32 %v435, 0.0
    %v564 = vmax.f32 %v436, 0.0
    %v565 = vmax.f32 %v437, 0.0
    %v566 = vmax.f32 %v438, 0.0
    %v567 = vmax.f32 %v439, 0.0
    %v568 = vmax.f32 %v440, 0.0
    %v569 = vmax.f32 %v441, 0.0
    %v570 = vmax.f32 %v442, 0.0
    %v571 = vmax.f32 %v443, 0.0
    %v572 = vmax.f32 %v444, 0.0
    %v573 = vmax.f32 %v445, 0.0
    %v574 = vmax.f32 %v446, 0.0
    %v575 = vmax.f32 %v447, 0.0
    %v576 = vmax.f32 %v448, 0.0
    %v577 = vmax.f32 %v449, 0.0
    %v578 = vmax.f32 %v450, 0.0
    %v579 = vmax.f32 %v451, 0.0
    %v580 = vmax.f32 %v452, 0.0
    %v581 = vmax.f32 %v453, 0.0
    %v582 = vmax.f32 %v454, 0.0
    %v583 = vmax.f32 %v455, 0.0
    %v584 = vmax.f32 %v456, 0.0
    %v585 = vmax.f32 %v457, 0.0
    %v586 = vmax.f32 %v458, 0.0
    %v587 = vmax.f32 %v459, 0.0
    %v588 = vmax.f32 %v460, 0.0
    %v589 = vmax.f32 %v461, 0.0
    %v590 = vmax.f32 %v462, 0.0
    %v591 = vmax.f32 %v463, 0.0
    %v592 = vmax.f32 %v464, 0.0
    %v593 = vmax.f32 %v465, 0.0
    %v594 = vmax.f32 %v466, 0.0
    %v595 = vmax.f32 %v467, 0.0
    %v596 = vmax.f32 %v468, 0.0
    %v597 = vmax.f32 %v469, 0.0
    %v598 = vmax.f32 %v470, 0.0
    %v599 = vmax.f32 %v471, 0.0
    %v600 = vmax.f32 %v472, 0.0
    %v601 = vmax.f32 %v473, 0.0
    %v602 = vmax.f32 %v474, 0.0
    %v603 = vmax.f32 %v475, 0.0
    %v604 = vmax.f32 %v476, 0.0
    %v605 = vmax.f32 %v477, 0.0
    %v606 = vmax.f32 %v478, 0.0
    %v607 = vmax.f32 %v479, 0.0
    %v608 = vmax.f32 %v480, 0.0
    %v609 = vmax.f32 %v481, 0.0
    %v610 = vmax.f32 %v482, 0.0
    %v611 = vmax.f32 %v483, 0.0
    %v612 = vmax.f32 %v484, 0.0
    %v613 = vmax.f32 %v485, 0.0
    %v614 = vmax.f32 %v486, 0.0
    %v615 = vmax.f32 %v487, 0.0
    %v616 = vmax.f32 %v488, 0.0
    %v617 = vmax.f32 %v489, 0.0
    %v618 = vmax.f32 %v490, 0.0
    %v619 = vmax.f32 %v491, 0.0
    %v620 = vpack.c.bf16 %v500, %v492
    %v621 = vpack.c.bf16 %v501, %v493
    %v622 = vpack.c.bf16 %v502, %v494
    %v623 = vpack.c.bf16 %v503, %v495
    %v624 = vpack.c.bf16 %v504, %v496
    %v625 = vpack.c.bf16 %v505, %v497
    %v626 = vpack.c.bf16 %v506, %v498
    %v627 = vpack.c.bf16 %v507, %v499
    %v628 = vpack.c.bf16 %v516, %v508
    %v629 = vpack.c.bf16 %v517, %v509
    %v630 = vpack.c.bf16 %v518, %v510
    %v631 = vpack.c.bf16 %v519, %v511
    %v632 = vpack.c.bf16 %v520, %v512
    %v633 = vpack.c.bf16 %v521, %v513
    %v634 = vpack.c.bf16 %v522, %v514
    %v635 = vpack.c.bf16 %v523, %v515
    %v636 = vpack.c.bf16 %v532, %v524
    %v637 = vpack.c.bf16 %v533, %v525
    %v638 = vpack.c.bf16 %v534, %v526
    %v639 = vpack.c.bf16 %v535, %v527
    %v640 = vpack.c.bf16 %v536, %v528
    %v641 = vpack.c.bf16 %v537, %v529
    %v642 = vpack.c.bf16 %v538, %v530
    %v643 = vpack.c.bf16 %v539, %v531
    %v644 = vpack.c.bf16 %v548, %v540
    %v645 = vpack.c.bf16 %v549, %v541
    %v646 = vpack.c.bf16 %v550, %v542
    %v647 = vpack.c.bf16 %v551, %v543
    %v648 = vpack.c.bf16 %v552, %v544
    %v649 = vpack.c.bf16 %v553, %v545
    %v650 = vpack.c.bf16 %v554, %v546
    %v651 = vpack.c.bf16 %v555, %v547
    %v652 = vpack.c.bf16 %v564, %v556
    %v653 = vpack.c.bf16 %v565, %v557
    %v654 = vpack.c.bf16 %v566, %v558
    %v655 = vpack.c.bf16 %v567, %v559
    %v656 = vpack.c.bf16 %v568, %v560
    %v657 = vpack.c.bf16 %v569, %v561
    %v658 = vpack.c.bf16 %v570, %v562
    %v659 = vpack.c.bf16 %v571, %v563
    %v660 = vpack.c.bf16 %v580, %v572
    %v661 = vpack.c.bf16 %v581, %v573
    %v662 = vpack.c.bf16 %v582, %v574
    %v663 = vpack.c.bf16 %v583, %v575
    %v664 = vpack.c.bf16 %v584, %v576
    %v665 = vpack.c.bf16 %v585, %v577
    %v666 = vpack.c.bf16 %v586, %v578
    %v667 = vpack.c.bf16 %v587, %v579
    %v668 = vpack.c.bf16 %v596, %v588
    %v669 = vpack.c.bf16 %v597, %v589
    %v670 = vpack.c.bf16 %v598, %v590
    %v671 = vpack.c.bf16 %v599, %v591
    %v672 = vpack.c.bf16 %v600, %v592
    %v673 = vpack.c.bf16 %v601, %v593
    %v674 = vpack.c.bf16 %v602, %v594
    %v675 = vpack.c.bf16 %v603, %v595
    %v676 = vpack.c.bf16 %v612, %v604
    %v677 = vpack.c.bf16 %v613, %v605
    %v678 = vpack.c.bf16 %v614, %v606
    %v679 = vpack.c.bf16 %v615, %v607
    %v680 = vpack.c.bf16 %v616, %v608
    %v681 = vpack.c.bf16 %v617, %v609
    %v682 = vpack.c.bf16 %v618, %v610
    %v683 = vpack.c.bf16 %v619, %v611
    %v684 = vld [vmem:[#allocation5] sm:$0xff]
    %v685 = vld [vmem:[#allocation5 + $0x8] sm:$0xf]
    %v686 = vld [vmem:[#allocation5 + $0xc] sm:$0xff]
    %v687 = vld [vmem:[#allocation5 + $0x14] sm:$0xf]
    %v688 = vld [vmem:[#allocation5 + $0x18] sm:$0xff]
    %v689 = vld [vmem:[#allocation5 + $0x20] sm:$0xf]
    %v690 = vld [vmem:[#allocation5 + $0x24] sm:$0xff]
    %v691 = vld [vmem:[#allocation5 + $0x2c] sm:$0xf]
    %v692 = vld [vmem:[#allocation5 + $0x30] sm:$0xff]
    %v693 = vld [vmem:[#allocation5 + $0x38] sm:$0xf]
    %v694 = vld [vmem:[#allocation5 + $0x3c] sm:$0xff]
    %v695 = vld [vmem:[#allocation5 + $0x44] sm:$0xf]
    %v696 = vld [vmem:[#allocation5 + $0x48] sm:$0xff]
    %v697 = vld [vmem:[#allocation5 + $0x50] sm:$0xf]
    %v698 = vld [vmem:[#allocation5 + $0x54] sm:$0xff]
    %v699 = vld [vmem:[#allocation5 + $0x5c] sm:$0xf]
    %v700 = vld [vmem:[#allocation5 + $0x60] sm:$0xff]
    %v701 = vld [vmem:[#allocation5 + $0x68] sm:$0xf]
    %v702 = vld [vmem:[#allocation5 + $0x6c] sm:$0xff]
    %v703 = vld [vmem:[#allocation5 + $0x74] sm:$0xf]
    %v704 = vld [vmem:[#allocation5 + $0x78] sm:$0xff]
    %v705 = vld [vmem:[#allocation5 + $0x80] sm:$0xf]
    %v706 = vld [vmem:[#allocation5 + $0x84] sm:$0xff]
    %v707 = vld [vmem:[#allocation5 + $0x8c] sm:$0xf]
    %v708 = vld [vmem:[#allocation5 + $0x90] sm:$0xff]
    %v709 = vld [vmem:[#allocation5 + $0x98] sm:$0xf]
    %v710 = vld [vmem:[#allocation5 + $0x9c] sm:$0xff]
    %v711 = vld [vmem:[#allocation5 + $0xa4] sm:$0xf]
    %v712 = vld [vmem:[#allocation5 + $0xa8] sm:$0xff]
    %v713 = vld [vmem:[#allocation5 + $0xb0] sm:$0xf]
    %v714 = vld [vmem:[#allocation5 + $0xb4] sm:$0xff]
    %v715 = vld [vmem:[#allocation5 + $0xbc] sm:$0xf]
    %v716 = vld [vmem:[#allocation5 + $0xc0] sm:$0xff]
    %v717 = vld [vmem:[#allocation5 + $0xc8] sm:$0xf]
    %v718 = vld [vmem:[#allocation5 + $0xcc] sm:$0xff]
    %v719 = vld [vmem:[#allocation5 + $0xd4] sm:$0xf]
    %v720 = vld [vmem:[#allocation5 + $0xd8] sm:$0xff]
    %v721 = vld [vmem:[#allocation5 + $0xe0] sm:$0xf]
    %v722 = vld [vmem:[#allocation5 + $0xe4] sm:$0xff]
    %v723 = vld [vmem:[#allocation5 + $0xec] sm:$0xf]
    %v724 = vld [vmem:[#allocation5 + $0xf0] sm:$0xff]
    %v725 = vld [vmem:[#allocation5 + $0xf8] sm:$0xf]
    %v726 = vld [vmem:[#allocation5 + $0xfc] sm:$0xff]
    %v727 = vld [vmem:[#allocation5 + $0x104] sm:$0xf]
    %v728 = vld [vmem:[#allocation5 + $0x108] sm:$0xff]
    %v729 = vld [vmem:[#allocation5 + $0x110] sm:$0xf]
    %v730 = vld [vmem:[#allocation5 + $0x114] sm:$0xff]
    %v731 = vld [vmem:[#allocation5 + $0x11c] sm:$0xf]
    %v732 = vld [vmem:[#allocation5 + $0x120] sm:$0xff]
    %v733 = vld [vmem:[#allocation5 + $0x128] sm:$0xf]
    %v734 = vld [vmem:[#allocation5 + $0x12c] sm:$0xff]
    %v735 = vld [vmem:[#allocation5 + $0x134] sm:$0xf]
    %v736 = vld [vmem:[#allocation5 + $0x138] sm:$0xff]
    %v737 = vld [vmem:[#allocation5 + $0x140] sm:$0xf]
    %v738 = vld [vmem:[#allocation5 + $0x144] sm:$0xff]
    %v739 = vld [vmem:[#allocation5 + $0x14c] sm:$0xf]
    %v740 = vld [vmem:[#allocation5 + $0x150] sm:$0xff]
    %v741 = vld [vmem:[#allocation5 + $0x158] sm:$0xf]
    %v742 = vld [vmem:[#allocation5 + $0x15c] sm:$0xff]
    %v743 = vld [vmem:[#allocation5 + $0x164] sm:$0xf]
    %v744 = vld [vmem:[#allocation5 + $0x168] sm:$0xff]
    %v745 = vld [vmem:[#allocation5 + $0x170] sm:$0xf]
    %v746 = vld [vmem:[#allocation5 + $0x174] sm:$0xff]
    %v747 = vld [vmem:[#allocation5 + $0x17c] sm:$0xf]
    %v748 = vld [vmem:[#allocation5 + $0x180] sm:$0xff]
    %v749 = vld [vmem:[#allocation5 + $0x188] sm:$0xf]
    %v750 = vld [vmem:[#allocation5 + $0x18c] sm:$0xff]
    %v751 = vld [vmem:[#allocation5 + $0x194] sm:$0xf]
    %v752 = vld [vmem:[#allocation5 + $0x198] sm:$0xff]
    %v753 = vld [vmem:[#allocation5 + $0x1a0] sm:$0xf]
    %v754 = vld [vmem:[#allocation5 + $0x1a4] sm:$0xff]
    %v755 = vld [vmem:[#allocation5 + $0x1ac] sm:$0xf]
    %v756 = vld [vmem:[#allocation5 + $0x1b0] sm:$0xff]
    %v757 = vld [vmem:[#allocation5 + $0x1b8] sm:$0xf]
    %v758 = vld [vmem:[#allocation5 + $0x1bc] sm:$0xff]
    %v759 = vld [vmem:[#allocation5 + $0x1c4] sm:$0xf]
    %v760 = vld [vmem:[#allocation5 + $0x1c8] sm:$0xff]
    %v761 = vld [vmem:[#allocation5 + $0x1d0] sm:$0xf]
    %v762 = vld [vmem:[#allocation5 + $0x1d4] sm:$0xff]
    %v763 = vld [vmem:[#allocation5 + $0x1dc] sm:$0xf]
    %v764 = vld [vmem:[#allocation5 + $0x1e0] sm:$0xff]
    %v765 = vld [vmem:[#allocation5 + $0x1e8] sm:$0xf]
    %v766 = vld [vmem:[#allocation5 + $0x1ec] sm:$0xff]
    %v767 = vld [vmem:[#allocation5 + $0x1f4] sm:$0xf]
    %v768 = vld [vmem:[#allocation5 + $0x1f8] sm:$0xff]
    %v769 = vld [vmem:[#allocation5 + $0x200] sm:$0xf]
    %v770 = vld [vmem:[#allocation5 + $0x204] sm:$0xff]
    %v771 = vld [vmem:[#allocation5 + $0x20c] sm:$0xf]
    %v772 = vld [vmem:[#allocation5 + $0x210] sm:$0xff]
    %v773 = vld [vmem:[#allocation5 + $0x218] sm:$0xf]
    %v774 = vld [vmem:[#allocation5 + $0x21c] sm:$0xff]
    %v775 = vld [vmem:[#allocation5 + $0x224] sm:$0xf]
    %v776 = vld [vmem:[#allocation5 + $0x228] sm:$0xff]
    %v777 = vld [vmem:[#allocation5 + $0x230] sm:$0xf]
    %v778 = vld [vmem:[#allocation5 + $0x234] sm:$0xff]
    %v779 = vld [vmem:[#allocation5 + $0x23c] sm:$0xf]
    %v780 = vld [vmem:[#allocation5 + $0x240] sm:$0xff]
    %v781 = vld [vmem:[#allocation5 + $0x248] sm:$0xf]
    %v782 = vld [vmem:[#allocation5 + $0x24c] sm:$0xff]
    %v783 = vld [vmem:[#allocation5 + $0x254] sm:$0xf]
    %v784 = vld [vmem:[#allocation5 + $0x258] sm:$0xff]
    %v785 = vld [vmem:[#allocation5 + $0x260] sm:$0xf]
    %v786 = vld [vmem:[#allocation5 + $0x264] sm:$0xff]
    %v787 = vld [vmem:[#allocation5 + $0x26c] sm:$0xf]
    %v788 = vld [vmem:[#allocation5 + $0x270] sm:$0xff]
    %v789 = vld [vmem:[#allocation5 + $0x278] sm:$0xf]
    %v790 = vld [vmem:[#allocation5 + $0x27c] sm:$0xff]
    %v791 = vld [vmem:[#allocation5 + $0x284] sm:$0xf]
    %v792 = vld [vmem:[#allocation5 + $0x288] sm:$0xff]
    %v793 = vld [vmem:[#allocation5 + $0x290] sm:$0xf]
    %v794 = vld [vmem:[#allocation5 + $0x294] sm:$0xff]
    %v795 = vld [vmem:[#allocation5 + $0x29c] sm:$0xf]
    %v796 = vld [vmem:[#allocation5 + $0x2a0] sm:$0xff]
    %v797 = vld [vmem:[#allocation5 + $0x2a8] sm:$0xf]
    %v798 = vld [vmem:[#allocation5 + $0x2ac] sm:$0xff]
    %v799 = vld [vmem:[#allocation5 + $0x2b4] sm:$0xf]
    %v800 = vld [vmem:[#allocation5 + $0x2b8] sm:$0xff]
    %v801 = vld [vmem:[#allocation5 + $0x2c0] sm:$0xf]
    %v802 = vld [vmem:[#allocation5 + $0x2c4] sm:$0xff]
    %v803 = vld [vmem:[#allocation5 + $0x2cc] sm:$0xf]
    %v804 = vld [vmem:[#allocation5 + $0x2d0] sm:$0xff]
    %v805 = vld [vmem:[#allocation5 + $0x2d8] sm:$0xf]
    %v806 = vld [vmem:[#allocation5 + $0x2dc] sm:$0xff]
    %v807 = vld [vmem:[#allocation5 + $0x2e4] sm:$0xf]
    %v808 = vld [vmem:[#allocation5 + $0x2e8] sm:$0xff]
    %v809 = vld [vmem:[#allocation5 + $0x2f0] sm:$0xf]
    %v810 = vld [vmem:[#allocation5 + $0x2f4] sm:$0xff]
    %v811 = vld [vmem:[#allocation5 + $0x2fc] sm:$0xf]
    %v812 = vld [vmem:[#allocation5 + $0x300] sm:$0xff]
    %v813 = vld [vmem:[#allocation5 + $0x308] sm:$0xf]
    %v814 = vld [vmem:[#allocation5 + $0x30c] sm:$0xff]
    %v815 = vld [vmem:[#allocation5 + $0x314] sm:$0xf]
    %v816 = vld [vmem:[#allocation5 + $0x318] sm:$0xff]
    %v817 = vld [vmem:[#allocation5 + $0x320] sm:$0xf]
    %v818 = vld [vmem:[#allocation5 + $0x324] sm:$0xff]
    %v819 = vld [vmem:[#allocation5 + $0x32c] sm:$0xf]
    %v820 = vld [vmem:[#allocation5 + $0x330] sm:$0xff]
    %v821 = vld [vmem:[#allocation5 + $0x338] sm:$0xf]
    %v822 = vld [vmem:[#allocation5 + $0x33c] sm:$0xff]
    %v823 = vld [vmem:[#allocation5 + $0x344] sm:$0xf]
    %v824 = vld [vmem:[#allocation5 + $0x348] sm:$0xff]
    %v825 = vld [vmem:[#allocation5 + $0x350] sm:$0xf]
    %v826 = vld [vmem:[#allocation5 + $0x354] sm:$0xff]
    %v827 = vld [vmem:[#allocation5 + $0x35c] sm:$0xf]
    %v828 = vld [vmem:[#allocation5 + $0x360] sm:$0xff]
    %v829 = vld [vmem:[#allocation5 + $0x368] sm:$0xf]
    %v830 = vld [vmem:[#allocation5 + $0x36c] sm:$0xff]
    %v831 = vld [vmem:[#allocation5 + $0x374] sm:$0xf]
    %v832 = vld [vmem:[#allocation5 + $0x378] sm:$0xff]
    %v833 = vld [vmem:[#allocation5 + $0x380] sm:$0xf]
    %v834 = vld [vmem:[#allocation5 + $0x384] sm:$0xff]
    %v835 = vld [vmem:[#allocation5 + $0x38c] sm:$0xf]
    %v836 = vld [vmem:[#allocation5 + $0x390] sm:$0xff]
    %v837 = vld [vmem:[#allocation5 + $0x398] sm:$0xf]
    %v838 = vld [vmem:[#allocation5 + $0x39c] sm:$0xff]
    %v839 = vld [vmem:[#allocation5 + $0x3a4] sm:$0xf]
    %v840 = vld [vmem:[#allocation5 + $0x3a8] sm:$0xff]
    %v841 = vld [vmem:[#allocation5 + $0x3b0] sm:$0xf]
    %v842 = vld [vmem:[#allocation5 + $0x3b4] sm:$0xff]
    %v843 = vld [vmem:[#allocation5 + $0x3bc] sm:$0xf]
    %v844 = vld [vmem:[#allocation5 + $0x3c0] sm:$0xff]
    %v845 = vld [vmem:[#allocation5 + $0x3c8] sm:$0xf]
    %v846 = vld [vmem:[#allocation5 + $0x3cc] sm:$0xff]
    %v847 = vld [vmem:[#allocation5 + $0x3d4] sm:$0xf]
    %v848 = vld [vmem:[#allocation5 + $0x3d8] sm:$0xff]
    %v849 = vld [vmem:[#allocation5 + $0x3e0] sm:$0xf]
    %v850 = vld [vmem:[#allocation5 + $0x3e4] sm:$0xff]
    %v851 = vld [vmem:[#allocation5 + $0x3ec] sm:$0xf]
    %v852 = vld [vmem:[#allocation5 + $0x3f0] sm:$0xff]
    %v853 = vld [vmem:[#allocation5 + $0x3f8] sm:$0xf]
    %v854 = vld [vmem:[#allocation5 + $0x3fc] sm:$0xff]
    %v855 = vld [vmem:[#allocation5 + $0x404] sm:$0xf]
    %v856 = vld [vmem:[#allocation5 + $0x408] sm:$0xff]
    %v857 = vld [vmem:[#allocation5 + $0x410] sm:$0xf]
    %v858 = vld [vmem:[#allocation5 + $0x414] sm:$0xff]
    %v859 = vld [vmem:[#allocation5 + $0x41c] sm:$0xf]
    %v860 = vld [vmem:[#allocation5 + $0x420] sm:$0xff]
    %v861 = vld [vmem:[#allocation5 + $0x428] sm:$0xf]
    %v862 = vld [vmem:[#allocation5 + $0x42c] sm:$0xff]
    %v863 = vld [vmem:[#allocation5 + $0x434] sm:$0xf]
    %v864 = vld [vmem:[#allocation5 + $0x438] sm:$0xff]
    %v865 = vld [vmem:[#allocation5 + $0x440] sm:$0xf]
    %v866 = vld [vmem:[#allocation5 + $0x444] sm:$0xff]
    %v867 = vld [vmem:[#allocation5 + $0x44c] sm:$0xf]
    %v868 = vld [vmem:[#allocation5 + $0x450] sm:$0xff]
    %v869 = vld [vmem:[#allocation5 + $0x458] sm:$0xf]
    %v870 = vld [vmem:[#allocation5 + $0x45c] sm:$0xff]
    %v871 = vld [vmem:[#allocation5 + $0x464] sm:$0xf]
    %v872 = vld [vmem:[#allocation5 + $0x468] sm:$0xff]
    %v873 = vld [vmem:[#allocation5 + $0x470] sm:$0xf]
    %v874 = vld [vmem:[#allocation5 + $0x474] sm:$0xff]
    %v875 = vld [vmem:[#allocation5 + $0x47c] sm:$0xf]
    %v876 = vld [vmem:[#allocation5 + $0x480] sm:$0xff]
    %v877 = vld [vmem:[#allocation5 + $0x488] sm:$0xf]
    %v878 = vld [vmem:[#allocation5 + $0x48c] sm:$0xff]
    %v879 = vld [vmem:[#allocation5 + $0x494] sm:$0xf]
    %v880 = vld [vmem:[#allocation5 + $0x498] sm:$0xff]
    %v881 = vld [vmem:[#allocation5 + $0x4a0] sm:$0xf]
    %v882 = vld [vmem:[#allocation5 + $0x4a4] sm:$0xff]
    %v883 = vld [vmem:[#allocation5 + $0x4ac] sm:$0xf]
    %v884 = vld [vmem:[#allocation5 + $0x4b0] sm:$0xff]
    %v885 = vld [vmem:[#allocation5 + $0x4b8] sm:$0xf]
    %v886 = vld [vmem:[#allocation5 + $0x4bc] sm:$0xff]
    %v887 = vld [vmem:[#allocation5 + $0x4c4] sm:$0xf]
    %v888 = vld [vmem:[#allocation5 + $0x4c8] sm:$0xff]
    %v889 = vld [vmem:[#allocation5 + $0x4d0] sm:$0xf]
    %v890 = vld [vmem:[#allocation5 + $0x4d4] sm:$0xff]
    %v891 = vld [vmem:[#allocation5 + $0x4dc] sm:$0xf]
    %v892 = vld [vmem:[#allocation5 + $0x4e0] sm:$0xff]
    %v893 = vld [vmem:[#allocation5 + $0x4e8] sm:$0xf]
    %v894 = vld [vmem:[#allocation5 + $0x4ec] sm:$0xff]
    %v895 = vld [vmem:[#allocation5 + $0x4f4] sm:$0xf]
    %v896 = vld [vmem:[#allocation5 + $0x4f8] sm:$0xff]
    %v897 = vld [vmem:[#allocation5 + $0x500] sm:$0xf]
    %v898 = vld [vmem:[#allocation5 + $0x504] sm:$0xff]
    %v899 = vld [vmem:[#allocation5 + $0x50c] sm:$0xf]
    %v900 = vld [vmem:[#allocation5 + $0x510] sm:$0xff]
    %v901 = vld [vmem:[#allocation5 + $0x518] sm:$0xf]
    %v902 = vld [vmem:[#allocation5 + $0x51c] sm:$0xff]
    %v903 = vld [vmem:[#allocation5 + $0x524] sm:$0xf]
    %v904 = vld [vmem:[#allocation5 + $0x528] sm:$0xff]
    %v905 = vld [vmem:[#allocation5 + $0x530] sm:$0xf]
    %v906 = vld [vmem:[#allocation5 + $0x534] sm:$0xff]
    %v907 = vld [vmem:[#allocation5 + $0x53c] sm:$0xf]
    %v908 = vld [vmem:[#allocation5 + $0x540] sm:$0xff]
    %v909 = vld [vmem:[#allocation5 + $0x548] sm:$0xf]
    %v910 = vld [vmem:[#allocation5 + $0x54c] sm:$0xff]
    %v911 = vld [vmem:[#allocation5 + $0x554] sm:$0xf]
    %v912 = vld [vmem:[#allocation5 + $0x558] sm:$0xff]
    %v913 = vld [vmem:[#allocation5 + $0x560] sm:$0xf]
    %v914 = vld [vmem:[#allocation5 + $0x564] sm:$0xff]
    %v915 = vld [vmem:[#allocation5 + $0x56c] sm:$0xf]
    %v916 = vld [vmem:[#allocation5 + $0x570] sm:$0xff]
    %v917 = vld [vmem:[#allocation5 + $0x578] sm:$0xf]
    %v918 = vld [vmem:[#allocation5 + $0x57c] sm:$0xff]
    %v919 = vld [vmem:[#allocation5 + $0x584] sm:$0xf]
    %v920 = vld [vmem:[#allocation5 + $0x588] sm:$0xff]
    %v921 = vld [vmem:[#allocation5 + $0x590] sm:$0xf]
    %v922 = vld [vmem:[#allocation5 + $0x594] sm:$0xff]
    %v923 = vld [vmem:[#allocation5 + $0x59c] sm:$0xf]
    %v924 = vld [vmem:[#allocation5 + $0x5a0] sm:$0xff]
    %v925 = vld [vmem:[#allocation5 + $0x5a8] sm:$0xf]
    %v926 = vld [vmem:[#allocation5 + $0x5ac] sm:$0xff]
    %v927 = vld [vmem:[#allocation5 + $0x5b4] sm:$0xf]
    %v928 = vld [vmem:[#allocation5 + $0x5b8] sm:$0xff]
    %v929 = vld [vmem:[#allocation5 + $0x5c0] sm:$0xf]
    %v930 = vld [vmem:[#allocation5 + $0x5c4] sm:$0xff]
    %v931 = vld [vmem:[#allocation5 + $0x5cc] sm:$0xf]
    %v932 = vld [vmem:[#allocation5 + $0x5d0] sm:$0xff]
    %v933 = vld [vmem:[#allocation5 + $0x5d8] sm:$0xf]
    %v934 = vld [vmem:[#allocation5 + $0x5dc] sm:$0xff]
    %v935 = vld [vmem:[#allocation5 + $0x5e4] sm:$0xf]
    %v936 = vld [vmem:[#allocation5 + $0x5e8] sm:$0xff]
    %v937 = vld [vmem:[#allocation5 + $0x5f0] sm:$0xf]
    %v938 = vld [vmem:[#allocation5 + $0x5f4] sm:$0xff]
    %v939 = vld [vmem:[#allocation5 + $0x5fc] sm:$0xf]
    %v940 = vld [vmem:[#allocation7] sm:$0x7]
    %v942 = vperm.slane %v940, 0
    %v943 = vperm.slane %v940, 1
    %v944 = vperm.slane %v940, 2
    %v1204 = vunpack.c.l.b16 %v684
    %v1205 = vunpack.c.h.b16 %v684
    %v1206 = vunpack.c.l.b16 %v685
    %v1207 = vunpack.c.l.b16 %v686
    %v1208 = vunpack.c.h.b16 %v686
    %v1209 = vunpack.c.l.b16 %v687
    %v1210 = vunpack.c.l.b16 %v688
    %v1211 = vunpack.c.h.b16 %v688
    %v1212 = vunpack.c.l.b16 %v689
    %v1213 = vunpack.c.l.b16 %v690
    %v1214 = vunpack.c.h.b16 %v690
    %v1215 = vunpack.c.l.b16 %v691
    %v1216 = vunpack.c.l.b16 %v692
    %v1217 = vunpack.c.h.b16 %v692
    %v1218 = vunpack.c.l.b16 %v693
    %v1219 = vunpack.c.l.b16 %v694
    %v1220 = vunpack.c.h.b16 %v694
    %v1221 = vunpack.c.l.b16 %v695
    %v1222 = vunpack.c.l.b16 %v696
    %v1223 = vunpack.c.h.b16 %v696
    %v1224 = vunpack.c.l.b16 %v697
    %v1225 = vunpack.c.l.b16 %v698
    %v1226 = vunpack.c.h.b16 %v698
    %v1227 = vunpack.c.l.b16 %v699
    %v1228 = vunpack.c.l.b16 %v700
    %v1229 = vunpack.c.h.b16 %v700
    %v1230 = vunpack.c.l.b16 %v701
    %v1231 = vunpack.c.l.b16 %v702
    %v1232 = vunpack.c.h.b16 %v702
    %v1233 = vunpack.c.l.b16 %v703
    %v1234 = vunpack.c.l.b16 %v704
    %v1235 = vunpack.c.h.b16 %v704
    %v1236 = vunpack.c.l.b16 %v705
    %v1237 = vunpack.c.l.b16 %v706
    %v1238 = vunpack.c.h.b16 %v706
    %v1239 = vunpack.c.l.b16 %v707
    %v1240 = vunpack.c.l.b16 %v708
    %v1241 = vunpack.c.h.b16 %v708
    %v1242 = vunpack.c.l.b16 %v709
    %v1243 = vunpack.c.l.b16 %v710
    %v1244 = vunpack.c.h.b16 %v710
    %v1245 = vunpack.c.l.b16 %v711
    %v1246 = vunpack.c.l.b16 %v712
    %v1247 = vunpack.c.h.b16 %v712
    %v1248 = vunpack.c.l.b16 %v713
    %v1249 = vunpack.c.l.b16 %v714
    %v1250 = vunpack.c.h.b16 %v714
    %v1251 = vunpack.c.l.b16 %v715
    %v1252 = vunpack.c.l.b16 %v716
    %v1253 = vunpack.c.h.b16 %v716
    %v1254 = vunpack.c.l.b16 %v717
    %v1255 = vunpack.c.l.b16 %v718
    %v1256 = vunpack.c.h.b16 %v718
    %v1257 = vunpack.c.l.b16 %v719
    %v1258 = vunpack.c.l.b16 %v720
    %v1259 = vunpack.c.h.b16 %v720
    %v1260 = vunpack.c.l.b16 %v721
    %v1261 = vunpack.c.l.b16 %v722
    %v1262 = vunpack.c.h.b16 %v722
    %v1263 = vunpack.c.l.b16 %v723
    %v1264 = vunpack.c.l.b16 %v724
    %v1265 = vunpack.c.h.b16 %v724
    %v1266 = vunpack.c.l.b16 %v725
    %v1267 = vunpack.c.l.b16 %v726
    %v1268 = vunpack.c.h.b16 %v726
    %v1269 = vunpack.c.l.b16 %v727
    %v1270 = vunpack.c.l.b16 %v728
    %v1271 = vunpack.c.h.b16 %v728
    %v1272 = vunpack.c.l.b16 %v729
    %v1273 = vunpack.c.l.b16 %v730
    %v1274 = vunpack.c.h.b16 %v730
    %v1275 = vunpack.c.l.b16 %v731
    %v1276 = vunpack.c.l.b16 %v732
    %v1277 = vunpack.c.h.b16 %v732
    %v1278 = vunpack.c.l.b16 %v733
    %v1279 = vunpack.c.l.b16 %v734
    %v1280 = vunpack.c.h.b16 %v734
    %v1281 = vunpack.c.l.b16 %v735
    %v1282 = vunpack.c.l.b16 %v736
    %v1283 = vunpack.c.h.b16 %v736
    %v1284 = vunpack.c.l.b16 %v737
    %v1285 = vunpack.c.l.b16 %v738
    %v1286 = vunpack.c.h.b16 %v738
    %v1287 = vunpack.c.l.b16 %v739
    %v1288 = vunpack.c.l.b16 %v740
    %v1289 = vunpack.c.h.b16 %v740
    %v1290 = vunpack.c.l.b16 %v741
    %v1291 = vunpack.c.l.b16 %v742
    %v1292 = vunpack.c.h.b16 %v742
    %v1293 = vunpack.c.l.b16 %v743
    %v1294 = vunpack.c.l.b16 %v744
    %v1295 = vunpack.c.h.b16 %v744
    %v1296 = vunpack.c.l.b16 %v745
    %v1297 = vunpack.c.l.b16 %v746
    %v1298 = vunpack.c.h.b16 %v746
    %v1299 = vunpack.c.l.b16 %v747
    %v1300 = vunpack.c.l.b16 %v748
    %v1301 = vunpack.c.h.b16 %v748
    %v1302 = vunpack.c.l.b16 %v749
    %v1303 = vunpack.c.l.b16 %v750
    %v1304 = vunpack.c.h.b16 %v750
    %v1305 = vunpack.c.l.b16 %v751
    %v1306 = vunpack.c.l.b16 %v752
    %v1307 = vunpack.c.h.b16 %v752
    %v1308 = vunpack.c.l.b16 %v753
    %v1309 = vunpack.c.l.b16 %v754
    %v1310 = vunpack.c.h.b16 %v754
    %v1311 = vunpack.c.l.b16 %v755
    %v1312 = vunpack.c.l.b16 %v756
    %v1313 = vunpack.c.h.b16 %v756
    %v1314 = vunpack.c.l.b16 %v757
    %v1315 = vunpack.c.l.b16 %v758
    %v1316 = vunpack.c.h.b16 %v758
    %v1317 = vunpack.c.l.b16 %v759
    %v1318 = vunpack.c.l.b16 %v760
    %v1319 = vunpack.c.h.b16 %v760
    %v1320 = vunpack.c.l.b16 %v761
    %v1321 = vunpack.c.l.b16 %v762
    %v1322 = vunpack.c.h.b16 %v762
    %v1323 = vunpack.c.l.b16 %v763
    %v1324 = vunpack.c.l.b16 %v764
    %v1325 = vunpack.c.h.b16 %v764
    %v1326 = vunpack.c.l.b16 %v765
    %v1327 = vunpack.c.l.b16 %v766
    %v1328 = vunpack.c.h.b16 %v766
    %v1329 = vunpack.c.l.b16 %v767
    %v1330 = vunpack.c.l.b16 %v768
    %v1331 = vunpack.c.h.b16 %v768
    %v1332 = vunpack.c.l.b16 %v769
    %v1333 = vunpack.c.l.b16 %v770
    %v1334 = vunpack.c.h.b16 %v770
    %v1335 = vunpack.c.l.b16 %v771
    %v1336 = vunpack.c.l.b16 %v772
    %v1337 = vunpack.c.h.b16 %v772
    %v1338 = vunpack.c.l.b16 %v773
    %v1339 = vunpack.c.l.b16 %v774
    %v1340 = vunpack.c.h.b16 %v774
    %v1341 = vunpack.c.l.b16 %v775
    %v1342 = vunpack.c.l.b16 %v776
    %v1343 = vunpack.c.h.b16 %v776
    %v1344 = vunpack.c.l.b16 %v777
    %v1345 = vunpack.c.l.b16 %v778
    %v1346 = vunpack.c.h.b16 %v778
    %v1347 = vunpack.c.l.b16 %v779
    %v1348 = vunpack.c.l.b16 %v780
    %v1349 = vunpack.c.h.b16 %v780
    %v1350 = vunpack.c.l.b16 %v781
    %v1351 = vunpack.c.l.b16 %v782
    %v1352 = vunpack.c.h.b16 %v782
    %v1353 = vunpack.c.l.b16 %v783
    %v1354 = vunpack.c.l.b16 %v784
    %v1355 = vunpack.c.h.b16 %v784
    %v1356 = vunpack.c.l.b16 %v785
    %v1357 = vunpack.c.l.b16 %v786
    %v1358 = vunpack.c.h.b16 %v786
    %v1359 = vunpack.c.l.b16 %v787
    %v1360 = vunpack.c.l.b16 %v788
    %v1361 = vunpack.c.h.b16 %v788
    %v1362 = vunpack.c.l.b16 %v789
    %v1363 = vunpack.c.l.b16 %v790
    %v1364 = vunpack.c.h.b16 %v790
    %v1365 = vunpack.c.l.b16 %v791
    %v1366 = vunpack.c.l.b16 %v792
    %v1367 = vunpack.c.h.b16 %v792
    %v1368 = vunpack.c.l.b16 %v793
    %v1369 = vunpack.c.l.b16 %v794
    %v1370 = vunpack.c.h.b16 %v794
    %v1371 = vunpack.c.l.b16 %v795
    %v1372 = vunpack.c.l.b16 %v796
    %v1373 = vunpack.c.h.b16 %v796
    %v1374 = vunpack.c.l.b16 %v797
    %v1375 = vunpack.c.l.b16 %v798
    %v1376 = vunpack.c.h.b16 %v798
    %v1377 = vunpack.c.l.b16 %v799
    %v1378 = vunpack.c.l.b16 %v800
    %v1379 = vunpack.c.h.b16 %v800
    %v1380 = vunpack.c.l.b16 %v801
    %v1381 = vunpack.c.l.b16 %v802
    %v1382 = vunpack.c.h.b16 %v802
    %v1383 = vunpack.c.l.b16 %v803
    %v1384 = vunpack.c.l.b16 %v804
    %v1385 = vunpack.c.h.b16 %v804
    %v1386 = vunpack.c.l.b16 %v805
    %v1387 = vunpack.c.l.b16 %v806
    %v1388 = vunpack.c.h.b16 %v806
    %v1389 = vunpack.c.l.b16 %v807
    %v1390 = vunpack.c.l.b16 %v808
    %v1391 = vunpack.c.h.b16 %v808
    %v1392 = vunpack.c.l.b16 %v809
    %v1393 = vunpack.c.l.b16 %v810
    %v1394 = vunpack.c.h.b16 %v810
    %v1395 = vunpack.c.l.b16 %v811
    %v1396 = vunpack.c.l.b16 %v812
    %v1397 = vunpack.c.h.b16 %v812
    %v1398 = vunpack.c.l.b16 %v813
    %v1399 = vunpack.c.l.b16 %v814
    %v1400 = vunpack.c.h.b16 %v814
    %v1401 = vunpack.c.l.b16 %v815
    %v1402 = vunpack.c.l.b16 %v816
    %v1403 = vunpack.c.h.b16 %v816
    %v1404 = vunpack.c.l.b16 %v817
    %v1405 = vunpack.c.l.b16 %v818
    %v1406 = vunpack.c.h.b16 %v818
    %v1407 = vunpack.c.l.b16 %v819
    %v1408 = vunpack.c.l.b16 %v820
    %v1409 = vunpack.c.h.b16 %v820
    %v1410 = vunpack.c.l.b16 %v821
    %v1411 = vunpack.c.l.b16 %v822
    %v1412 = vunpack.c.h.b16 %v822
    %v1413 = vunpack.c.l.b16 %v823
    %v1414 = vunpack.c.l.b16 %v824
    %v1415 = vunpack.c.h.b16 %v824
    %v1416 = vunpack.c.l.b16 %v825
    %v1417 = vunpack.c.l.b16 %v826
    %v1418 = vunpack.c.h.b16 %v826
    %v1419 = vunpack.c.l.b16 %v827
    %v1420 = vunpack.c.l.b16 %v828
    %v1421 = vunpack.c.h.b16 %v828
    %v1422 = vunpack.c.l.b16 %v829
    %v1423 = vunpack.c.l.b16 %v830
    %v1424 = vunpack.c.h.b16 %v830
    %v1425 = vunpack.c.l.b16 %v831
    %v1426 = vunpack.c.l.b16 %v832
    %v1427 = vunpack.c.h.b16 %v832
    %v1428 = vunpack.c.l.b16 %v833
    %v1429 = vunpack.c.l.b16 %v834
    %v1430 = vunpack.c.h.b16 %v834
    %v1431 = vunpack.c.l.b16 %v835
    %v1432 = vunpack.c.l.b16 %v836
    %v1433 = vunpack.c.h.b16 %v836
    %v1434 = vunpack.c.l.b16 %v837
    %v1435 = vunpack.c.l.b16 %v838
    %v1436 = vunpack.c.h.b16 %v838
    %v1437 = vunpack.c.l.b16 %v839
    %v1438 = vunpack.c.l.b16 %v840
    %v1439 = vunpack.c.h.b16 %v840
    %v1440 = vunpack.c.l.b16 %v841
    %v1441 = vunpack.c.l.b16 %v842
    %v1442 = vunpack.c.h.b16 %v842
    %v1443 = vunpack.c.l.b16 %v843
    %v1444 = vunpack.c.l.b16 %v844
    %v1445 = vunpack.c.h.b16 %v844
    %v1446 = vunpack.c.l.b16 %v845
    %v1447 = vunpack.c.l.b16 %v846
    %v1448 = vunpack.c.h.b16 %v846
    %v1449 = vunpack.c.l.b16 %v847
    %v1450 = vunpack.c.l.b16 %v848
    %v1451 = vunpack.c.h.b16 %v848
    %v1452 = vunpack.c.l.b16 %v849
    %v1453 = vunpack.c.l.b16 %v850
    %v1454 = vunpack.c.h.b16 %v850
    %v1455 = vunpack.c.l.b16 %v851
    %v1456 = vunpack.c.l.b16 %v852
    %v1457 = vunpack.c.h.b16 %v852
    %v1458 = vunpack.c.l.b16 %v853
    %v1459 = vunpack.c.l.b16 %v854
    %v1460 = vunpack.c.h.b16 %v854
    %v1461 = vunpack.c.l.b16 %v855
    %v1462 = vunpack.c.l.b16 %v856
    %v1463 = vunpack.c.h.b16 %v856
    %v1464 = vunpack.c.l.b16 %v857
    %v1465 = vunpack.c.l.b16 %v858
    %v1466 = vunpack.c.h.b16 %v858
    %v1467 = vunpack.c.l.b16 %v859
    %v1468 = vunpack.c.l.b16 %v860
    %v1469 = vunpack.c.h.b16 %v860
    %v1470 = vunpack.c.l.b16 %v861
    %v1471 = vunpack.c.l.b16 %v862
    %v1472 = vunpack.c.h.b16 %v862
    %v1473 = vunpack.c.l.b16 %v863
    %v1474 = vunpack.c.l.b16 %v864
    %v1475 = vunpack.c.h.b16 %v864
    %v1476 = vunpack.c.l.b16 %v865
    %v1477 = vunpack.c.l.b16 %v866
    %v1478 = vunpack.c.h.b16 %v866
    %v1479 = vunpack.c.l.b16 %v867
    %v1480 = vunpack.c.l.b16 %v868
    %v1481 = vunpack.c.h.b16 %v868
    %v1482 = vunpack.c.l.b16 %v869
    %v1483 = vunpack.c.l.b16 %v870
    %v1484 = vunpack.c.h.b16 %v870
    %v1485 = vunpack.c.l.b16 %v871
    %v1486 = vunpack.c.l.b16 %v872
    %v1487 = vunpack.c.h.b16 %v872
    %v1488 = vunpack.c.l.b16 %v873
    %v1489 = vunpack.c.l.b16 %v874
    %v1490 = vunpack.c.h.b16 %v874
    %v1491 = vunpack.c.l.b16 %v875
    %v1492 = vunpack.c.l.b16 %v876
    %v1493 = vunpack.c.h.b16 %v876
    %v1494 = vunpack.c.l.b16 %v877
    %v1495 = vunpack.c.l.b16 %v878
    %v1496 = vunpack.c.h.b16 %v878
    %v1497 = vunpack.c.l.b16 %v879
    %v1498 = vunpack.c.l.b16 %v880
    %v1499 = vunpack.c.h.b16 %v880
    %v1500 = vunpack.c.l.b16 %v881
    %v1501 = vunpack.c.l.b16 %v882
    %v1502 = vunpack.c.h.b16 %v882
    %v1503 = vunpack.c.l.b16 %v883
    %v1504 = vunpack.c.l.b16 %v884
    %v1505 = vunpack.c.h.b16 %v884
    %v1506 = vunpack.c.l.b16 %v885
    %v1507 = vunpack.c.l.b16 %v886
    %v1508 = vunpack.c.h.b16 %v886
    %v1509 = vunpack.c.l.b16 %v887
    %v1510 = vunpack.c.l.b16 %v888
    %v1511 = vunpack.c.h.b16 %v888
    %v1512 = vunpack.c.l.b16 %v889
    %v1513 = vunpack.c.l.b16 %v890
    %v1514 = vunpack.c.h.b16 %v890
    %v1515 = vunpack.c.l.b16 %v891
    %v1516 = vunpack.c.l.b16 %v892
    %v1517 = vunpack.c.h.b16 %v892
    %v1518 = vunpack.c.l.b16 %v893
    %v1519 = vunpack.c.l.b16 %v894
    %v1520 = vunpack.c.h.b16 %v894
    %v1521 = vunpack.c.l.b16 %v895
    %v1522 = vunpack.c.l.b16 %v896
    %v1523 = vunpack.c.h.b16 %v896
    %v1524 = vunpack.c.l.b16 %v897
    %v1525 = vunpack.c.l.b16 %v898
    %v1526 = vunpack.c.h.b16 %v898
    %v1527 = vunpack.c.l.b16 %v899
    %v1528 = vunpack.c.l.b16 %v900
    %v1529 = vunpack.c.h.b16 %v900
    %v1530 = vunpack.c.l.b16 %v901
    %v1531 = vunpack.c.l.b16 %v902
    %v1532 = vunpack.c.h.b16 %v902
    %v1533 = vunpack.c.l.b16 %v903
    %v1534 = vunpack.c.l.b16 %v904
    %v1535 = vunpack.c.h.b16 %v904
    %v1536 = vunpack.c.l.b16 %v905
    %v1537 = vunpack.c.l.b16 %v906
    %v1538 = vunpack.c.h.b16 %v906
    %v1539 = vunpack.c.l.b16 %v907
    %v1540 = vunpack.c.l.b16 %v908
    %v1541 = vunpack.c.h.b16 %v908
    %v1542 = vunpack.c.l.b16 %v909
    %v1543 = vunpack.c.l.b16 %v910
    %v1544 = vunpack.c.h.b16 %v910
    %v1545 = vunpack.c.l.b16 %v911
    %v1546 = vunpack.c.l.b16 %v912
    %v1547 = vunpack.c.h.b16 %v912
    %v1548 = vunpack.c.l.b16 %v913
    %v1549 = vunpack.c.l.b16 %v914
    %v1550 = vunpack.c.h.b16 %v914
    %v1551 = vunpack.c.l.b16 %v915
    %v1552 = vunpack.c.l.b16 %v916
    %v1553 = vunpack.c.h.b16 %v916
    %v1554 = vunpack.c.l.b16 %v917
    %v1555 = vunpack.c.l.b16 %v918
    %v1556 = vunpack.c.h.b16 %v918
    %v1557 = vunpack.c.l.b16 %v919
    %v1558 = vunpack.c.l.b16 %v920
    %v1559 = vunpack.c.h.b16 %v920
    %v1560 = vunpack.c.l.b16 %v921
    %v1561 = vunpack.c.l.b16 %v922
    %v1562 = vunpack.c.h.b16 %v922
    %v1563 = vunpack.c.l.b16 %v923
    %v1564 = vunpack.c.l.b16 %v924
    %v1565 = vunpack.c.h.b16 %v924
    %v1566 = vunpack.c.l.b16 %v925
    %v1567 = vunpack.c.l.b16 %v926
    %v1568 = vunpack.c.h.b16 %v926
    %v1569 = vunpack.c.l.b16 %v927
    %v1570 = vunpack.c.l.b16 %v928
    %v1571 = vunpack.c.h.b16 %v928
    %v1572 = vunpack.c.l.b16 %v929
    %v1573 = vunpack.c.l.b16 %v930
    %v1574 = vunpack.c.h.b16 %v930
    %v1575 = vunpack.c.l.b16 %v931
    %v1576 = vunpack.c.l.b16 %v932
    %v1577 = vunpack.c.h.b16 %v932
    %v1578 = vunpack.c.l.b16 %v933
    %v1579 = vunpack.c.l.b16 %v934
    %v1580 = vunpack.c.h.b16 %v934
    %v1581 = vunpack.c.l.b16 %v935
    %v1582 = vunpack.c.l.b16 %v936
    %v1583 = vunpack.c.h.b16 %v936
    %v1584 = vunpack.c.l.b16 %v937
    %v1585 = vunpack.c.l.b16 %v938
    %v1586 = vunpack.c.h.b16 %v938
    %v1587 = vunpack.c.l.b16 %v939
    %v1588 = vpack.c.b16 %v1207, %v1204
    %v1589 = vpack.c.b16 %v1208, %v1205
    %v1590 = vpack.c.b16 %v1209, %v1206
    %v1591 = vpack.c.b16 %v1213, %v1210
    %v1592 = vpack.c.b16 %v1214, %v1211
    %v1593 = vpack.c.b16 %v1215, %v1212
    %v1594 = vpack.c.b16 %v1219, %v1216
    %v1595 = vpack.c.b16 %v1220, %v1217
    %v1596 = vpack.c.b16 %v1221, %v1218
    %v1597 = vpack.c.b16 %v1225, %v1222
    %v1598 = vpack.c.b16 %v1226, %v1223
    %v1599 = vpack.c.b16 %v1227, %v1224
    %v1600 = vpack.c.b16 %v1231, %v1228
    %v1601 = vpack.c.b16 %v1232, %v1229
    %v1602 = vpack.c.b16 %v1233, %v1230
    %v1603 = vpack.c.b16 %v1237, %v1234
    %v1604 = vpack.c.b16 %v1238, %v1235
    %v1605 = vpack.c.b16 %v1239, %v1236
    %v1606 = vpack.c.b16 %v1243, %v1240
    %v1607 = vpack.c.b16 %v1244, %v1241
    %v1608 = vpack.c.b16 %v1245, %v1242
    %v1609 = vpack.c.b16 %v1249, %v1246
    %v1610 = vpack.c.b16 %v1250, %v1247
    %v1611 = vpack.c.b16 %v1251, %v1248
    %v1612 = vpack.c.b16 %v1255, %v1252
    %v1613 = vpack.c.b16 %v1256, %v1253
    %v1614 = vpack.c.b16 %v1257, %v1254
    %v1615 = vpack.c.b16 %v1261, %v1258
    %v1616 = vpack.c.b16 %v1262, %v1259
    %v1617 = vpack.c.b16 %v1263, %v1260
    %v1618 = vpack.c.b16 %v1267, %v1264
    %v1619 = vpack.c.b16 %v1268, %v1265
    %v1620 = vpack.c.b16 %v1269, %v1266
    %v1621 = vpack.c.b16 %v1273, %v1270
    %v1622 = vpack.c.b16 %v1274, %v1271
    %v1623 = vpack.c.b16 %v1275, %v1272
    %v1624 = vpack.c.b16 %v1279, %v1276
    %v1625 = vpack.c.b16 %v1280, %v1277
    %v1626 = vpack.c.b16 %v1281, %v1278
    %v1627 = vpack.c.b16 %v1285, %v1282
    %v1628 = vpack.c.b16 %v1286, %v1283
    %v1629 = vpack.c.b16 %v1287, %v1284
    %v1630 = vpack.c.b16 %v1291, %v1288
    %v1631 = vpack.c.b16 %v1292, %v1289
    %v1632 = vpack.c.b16 %v1293, %v1290
    %v1633 = vpack.c.b16 %v1297, %v1294
    %v1634 = vpack.c.b16 %v1298, %v1295
    %v1635 = vpack.c.b16 %v1299, %v1296
    %v1636 = vpack.c.b16 %v1303, %v1300
    %v1637 = vpack.c.b16 %v1304, %v1301
    %v1638 = vpack.c.b16 %v1305, %v1302
    %v1639 = vpack.c.b16 %v1309, %v1306
    %v1640 = vpack.c.b16 %v1310, %v1307
    %v1641 = vpack.c.b16 %v1311, %v1308
    %v1642 = vpack.c.b16 %v1315, %v1312
    %v1643 = vpack.c.b16 %v1316, %v1313
    %v1644 = vpack.c.b16 %v1317, %v1314
    %v1645 = vpack.c.b16 %v1321, %v1318
    %v1646 = vpack.c.b16 %v1322, %v1319
    %v1647 = vpack.c.b16 %v1323, %v1320
    %v1648 = vpack.c.b16 %v1327, %v1324
    %v1649 = vpack.c.b16 %v1328, %v1325
    %v1650 = vpack.c.b16 %v1329, %v1326
    %v1651 = vpack.c.b16 %v1333, %v1330
    %v1652 = vpack.c.b16 %v1334, %v1331
    %v1653 = vpack.c.b16 %v1335, %v1332
    %v1654 = vpack.c.b16 %v1339, %v1336
    %v1655 = vpack.c.b16 %v1340, %v1337
    %v1656 = vpack.c.b16 %v1341, %v1338
    %v1657 = vpack.c.b16 %v1345, %v1342
    %v1658 = vpack.c.b16 %v1346, %v1343
    %v1659 = vpack.c.b16 %v1347, %v1344
    %v1660 = vpack.c.b16 %v1351, %v1348
    %v1661 = vpack.c.b16 %v1352, %v1349
    %v1662 = vpack.c.b16 %v1353, %v1350
    %v1663 = vpack.c.b16 %v1357, %v1354
    %v1664 = vpack.c.b16 %v1358, %v1355
    %v1665 = vpack.c.b16 %v1359, %v1356
    %v1666 = vpack.c.b16 %v1363, %v1360
    %v1667 = vpack.c.b16 %v1364, %v1361
    %v1668 = vpack.c.b16 %v1365, %v1362
    %v1669 = vpack.c.b16 %v1369, %v1366
    %v1670 = vpack.c.b16 %v1370, %v1367
    %v1671 = vpack.c.b16 %v1371, %v1368
    %v1672 = vpack.c.b16 %v1375, %v1372
    %v1673 = vpack.c.b16 %v1376, %v1373
    %v1674 = vpack.c.b16 %v1377, %v1374
    %v1675 = vpack.c.b16 %v1381, %v1378
    %v1676 = vpack.c.b16 %v1382, %v1379
    %v1677 = vpack.c.b16 %v1383, %v1380
    %v1678 = vpack.c.b16 %v1387, %v1384
    %v1679 = vpack.c.b16 %v1388, %v1385
    %v1680 = vpack.c.b16 %v1389, %v1386
    %v1681 = vpack.c.b16 %v1393, %v1390
    %v1682 = vpack.c.b16 %v1394, %v1391
    %v1683 = vpack.c.b16 %v1395, %v1392
    %v1684 = vpack.c.b16 %v1399, %v1396
    %v1685 = vpack.c.b16 %v1400, %v1397
    %v1686 = vpack.c.b16 %v1401, %v1398
    %v1687 = vpack.c.b16 %v1405, %v1402
    %v1688 = vpack.c.b16 %v1406, %v1403
    %v1689 = vpack.c.b16 %v1407, %v1404
    %v1690 = vpack.c.b16 %v1411, %v1408
    %v1691 = vpack.c.b16 %v1412, %v1409
    %v1692 = vpack.c.b16 %v1413, %v1410
    %v1693 = vpack.c.b16 %v1417, %v1414
    %v1694 = vpack.c.b16 %v1418, %v1415
    %v1695 = vpack.c.b16 %v1419, %v1416
    %v1696 = vpack.c.b16 %v1423, %v1420
    %v1697 = vpack.c.b16 %v1424, %v1421
    %v1698 = vpack.c.b16 %v1425, %v1422
    %v1699 = vpack.c.b16 %v1429, %v1426
    %v1700 = vpack.c.b16 %v1430, %v1427
    %v1701 = vpack.c.b16 %v1431, %v1428
    %v1702 = vpack.c.b16 %v1435, %v1432
    %v1703 = vpack.c.b16 %v1436, %v1433
    %v1704 = vpack.c.b16 %v1437, %v1434
    %v1705 = vpack.c.b16 %v1441, %v1438
    %v1706 = vpack.c.b16 %v1442, %v1439
    %v1707 = vpack.c.b16 %v1443, %v1440
    %v1708 = vpack.c.b16 %v1447, %v1444
    %v1709 = vpack.c.b16 %v1448, %v1445
    %v1710 = vpack.c.b16 %v1449, %v1446
    %v1711 = vpack.c.b16 %v1453, %v1450
    %v1712 = vpack.c.b16 %v1454, %v1451
    %v1713 = vpack.c.b16 %v1455, %v1452
    %v1714 = vpack.c.b16 %v1459, %v1456
    %v1715 = vpack.c.b16 %v1460, %v1457
    %v1716 = vpack.c.b16 %v1461, %v1458
    %v1717 = vpack.c.b16 %v1465, %v1462
    %v1718 = vpack.c.b16 %v1466, %v1463
    %v1719 = vpack.c.b16 %v1467, %v1464
    %v1720 = vpack.c.b16 %v1471, %v1468
    %v1721 = vpack.c.b16 %v1472, %v1469
    %v1722 = vpack.c.b16 %v1473, %v1470
    %v1723 = vpack.c.b16 %v1477, %v1474
    %v1724 = vpack.c.b16 %v1478, %v1475
    %v1725 = vpack.c.b16 %v1479, %v1476
    %v1726 = vpack.c.b16 %v1483, %v1480
    %v1727 = vpack.c.b16 %v1484, %v1481
    %v1728 = vpack.c.b16 %v1485, %v1482
    %v1729 = vpack.c.b16 %v1489, %v1486
    %v1730 = vpack.c.b16 %v1490, %v1487
    %v1731 = vpack.c.b16 %v1491, %v1488
    %v1732 = vpack.c.b16 %v1495, %v1492
    %v1733 = vpack.c.b16 %v1496, %v1493
    %v1734 = vpack.c.b16 %v1497, %v1494
    %v1735 = vpack.c.b16 %v1501, %v1498
    %v1736 = vpack.c.b16 %v1502, %v1499
    %v1737 = vpack.c.b16 %v1503, %v1500
    %v1738 = vpack.c.b16 %v1507, %v1504
    %v1739 = vpack.c.b16 %v1508, %v1505
    %v1740 = vpack.c.b16 %v1509, %v1506
    %v1741 = vpack.c.b16 %v1513, %v1510
    %v1742 = vpack.c.b16 %v1514, %v1511
    %v1743 = vpack.c.b16 %v1515, %v1512
    %v1744 = vpack.c.b16 %v1519, %v1516
    %v1745 = vpack.c.b16 %v1520, %v1517
    %v1746 = vpack.c.b16 %v1521, %v1518
    %v1747 = vpack.c.b16 %v1525, %v1522
    %v1748 = vpack.c.b16 %v1526, %v1523
    %v1749 = vpack.c.b16 %v1527, %v1524
    %v1750 = vpack.c.b16 %v1531, %v1528
    %v1751 = vpack.c.b16 %v1532, %v1529
    %v1752 = vpack.c.b16 %v1533, %v1530
    %v1753 = vpack.c.b16 %v1537, %v1534
    %v1754 = vpack.c.b16 %v1538, %v1535
    %v1755 = vpack.c.b16 %v1539, %v1536
    %v1756 = vpack.c.b16 %v1543, %v1540
    %v1757 = vpack.c.b16 %v1544, %v1541
    %v1758 = vpack.c.b16 %v1545, %v1542
    %v1759 = vpack.c.b16 %v1549, %v1546
    %v1760 = vpack.c.b16 %v1550, %v1547
    %v1761 = vpack.c.b16 %v1551, %v1548
    %v1762 = vpack.c.b16 %v1555, %v1552
    %v1763 = vpack.c.b16 %v1556, %v1553
    %v1764 = vpack.c.b16 %v1557, %v1554
    %v1765 = vpack.c.b16 %v1561, %v1558
    %v1766 = vpack.c.b16 %v1562, %v1559
    %v1767 = vpack.c.b16 %v1563, %v1560
    %v1768 = vpack.c.b16 %v1567, %v1564
    %v1769 = vpack.c.b16 %v1568, %v1565
    %v1770 = vpack.c.b16 %v1569, %v1566
    %v1771 = vpack.c.b16 %v1573, %v1570
    %v1772 = vpack.c.b16 %v1574, %v1571
    %v1773 = vpack.c.b16 %v1575, %v1572
    %v1774 = vpack.c.b16 %v1579, %v1576
    %v1775 = vpack.c.b16 %v1580, %v1577
    %v1776 = vpack.c.b16 %v1581, %v1578
    %v1777 = vpack.c.b16 %v1585, %v1582
    %v1778 = vpack.c.b16 %v1586, %v1583
    %v1779 = vpack.c.b16 %v1587, %v1584
    %1972 = vmatpush.bf16.msra.mxu0 %v1609
    %1973 = vmatpush.bf16.msra.mxu0 %v1606
    %1974 = vmatpush.bf16.msra.mxu0 %v1603
    %1975 = vmatpush.bf16.msra.mxu0 %v1600
    %1976 = vmatpush.bf16.msra.mxu0 %v1597
    %1977 = vmatpush.bf16.msra.mxu0 %v1594
    %1978 = vmatpush.bf16.msra.mxu0 %v1591
    %1979 = vmatpush.bf16.msra.mxu0 %v1588
    %1980 = vmatmul.bf16.gmra.mxu0 %v620
    %v1981 = vpop.f32.mrf.mxu0
    %v1982 = vadd.f32 %v942, %v1981
    %v1983 = vpop.f32.mrf.mxu0
    %v1984 = vadd.f32 %v942, %v1983
    %1985 = vmatmul.bf16.gmra.mxu0 %v628
    %v1986 = vpop.f32.mrf.mxu0
    %v1987 = vadd.f32 %v942, %v1986
    %v1988 = vpop.f32.mrf.mxu0
    %v1989 = vadd.f32 %v942, %v1988
    %1990 = vmatmul.bf16.gmra.mxu0 %v636
    %v1991 = vpop.f32.mrf.mxu0
    %v1992 = vadd.f32 %v942, %v1991
    %v1993 = vpop.f32.mrf.mxu0
    %v1994 = vadd.f32 %v942, %v1993
    %1995 = vmatmul.bf16.gmra.mxu0 %v644
    %v1996 = vpop.f32.mrf.mxu0
    %v1997 = vadd.f32 %v942, %v1996
    %v1998 = vpop.f32.mrf.mxu0
    %v1999 = vadd.f32 %v942, %v1998
    %2000 = vmatmul.bf16.gmra.mxu0 %v652
    %v2001 = vpop.f32.mrf.mxu0
    %v2002 = vadd.f32 %v942, %v2001
    %v2003 = vpop.f32.mrf.mxu0
    %v2004 = vadd.f32 %v942, %v2003
    %2005 = vmatmul.bf16.gmra.mxu0 %v660
    %v2006 = vpop.f32.mrf.mxu0
    %v2007 = vadd.f32 %v942, %v2006
    %v2008 = vpop.f32.mrf.mxu0
    %v2009 = vadd.f32 %v942, %v2008
    %2010 = vmatmul.bf16.gmra.mxu0 %v668
    %v2011 = vpop.f32.mrf.mxu0
    %v2012 = vadd.f32 %v942, %v2011
    %v2013 = vpop.f32.mrf.mxu0
    %v2014 = vadd.f32 %v942, %v2013
    %2015 = vmatmul.bf16.gmra.mxu0 %v676
    %v2016 = vpop.f32.mrf.mxu0
    %v2017 = vadd.f32 %v942, %v2016
    %v2018 = vpop.f32.mrf.mxu0
    %v2019 = vadd.f32 %v942, %v2018
    %2020 = vdwg.mxu0
    %2021 = vmatpush.bf16.msra.mxu0 %v1633
    %2022 = vmatpush.bf16.msra.mxu0 %v1630
    %2023 = vmatpush.bf16.msra.mxu0 %v1627
    %2024 = vmatpush.bf16.msra.mxu0 %v1624
    %2025 = vmatpush.bf16.msra.mxu0 %v1621
    %2026 = vmatpush.bf16.msra.mxu0 %v1618
    %2027 = vmatpush.bf16.msra.mxu0 %v1615
    %2028 = vmatpush.bf16.msra.mxu0 %v1612
    %2029 = vmatmul.bf16.gmra.mxu0 %v621
    %v2030 = vpop.f32.mrf.mxu0
    %v2031 = vadd.f32 %v1982, %v2030
    %v2032 = vpop.f32.mrf.mxu0
    %v2033 = vadd.f32 %v1984, %v2032
    %2034 = vmatmul.bf16.gmra.mxu0 %v629
    %v2035 = vpop.f32.mrf.mxu0
    %v2036 = vadd.f32 %v1987, %v2035
    %v2037 = vpop.f32.mrf.mxu0
    %v2038 = vadd.f32 %v1989, %v2037
    %2039 = vmatmul.bf16.gmra.mxu0 %v637
    %v2040 = vpop.f32.mrf.mxu0
    %v2041 = vadd.f32 %v1992, %v2040
    %v2042 = vpop.f32.mrf.mxu0
    %v2043 = vadd.f32 %v1994, %v2042
    %2044 = vmatmul.bf16.gmra.mxu0 %v645
    %v2045 = vpop.f32.mrf.mxu0
    %v2046 = vadd.f32 %v1997, %v2045
    %v2047 = vpop.f32.mrf.mxu0
    %v2048 = vadd.f32 %v1999, %v2047
    %2049 = vmatmul.bf16.gmra.mxu0 %v653
    %v2050 = vpop.f32.mrf.mxu0
    %v2051 = vadd.f32 %v2002, %v2050
    %v2052 = vpop.f32.mrf.mxu0
    %v2053 = vadd.f32 %v2004, %v2052
    %2054 = vmatmul.bf16.gmra.mxu0 %v661
    %v2055 = vpop.f32.mrf.mxu0
    %v2056 = vadd.f32 %v2007, %v2055
    %v2057 = vpop.f32.mrf.mxu0
    %v2058 = vadd.f32 %v2009, %v2057
    %2059 = vmatmul.bf16.gmra.mxu0 %v669
    %v2060 = vpop.f32.mrf.mxu0
    %v2061 = vadd.f32 %v2012, %v2060
    %v2062 = vpop.f32.mrf.mxu0
    %v2063 = vadd.f32 %v2014, %v2062
    %2064 = vmatmul.bf16.gmra.mxu0 %v677
    %v2065 = vpop.f32.mrf.mxu0
    %v2066 = vadd.f32 %v2017, %v2065
    %v2067 = vpop.f32.mrf.mxu0
    %v2068 = vadd.f32 %v2019, %v2067
    %2069 = vdwg.mxu0
    %2070 = vmatpush.bf16.msra.mxu0 %v1657
    %2071 = vmatpush.bf16.msra.mxu0 %v1654
    %2072 = vmatpush.bf16.msra.mxu0 %v1651
    %2073 = vmatpush.bf16.msra.mxu0 %v1648
    %2074 = vmatpush.bf16.msra.mxu0 %v1645
    %2075 = vmatpush.bf16.msra.mxu0 %v1642
    %2076 = vmatpush.bf16.msra.mxu0 %v1639
    %2077 = vmatpush.bf16.msra.mxu0 %v1636
    %2078 = vmatmul.bf16.gmra.mxu0 %v622
    %v2079 = vpop.f32.mrf.mxu0
    %v2080 = vadd.f32 %v2031, %v2079
    %v2081 = vpop.f32.mrf.mxu0
    %v2082 = vadd.f32 %v2033, %v2081
    %2083 = vmatmul.bf16.gmra.mxu0 %v630
    %v2084 = vpop.f32.mrf.mxu0
    %v2085 = vadd.f32 %v2036, %v2084
    %v2086 = vpop.f32.mrf.mxu0
    %v2087 = vadd.f32 %v2038, %v2086
    %2088 = vmatmul.bf16.gmra.mxu0 %v638
    %v2089 = vpop.f32.mrf.mxu0
    %v2090 = vadd.f32 %v2041, %v2089
    %v2091 = vpop.f32.mrf.mxu0
    %v2092 = vadd.f32 %v2043, %v2091
    %2093 = vmatmul.bf16.gmra.mxu0 %v646
    %v2094 = vpop.f32.mrf.mxu0
    %v2095 = vadd.f32 %v2046, %v2094
    %v2096 = vpop.f32.mrf.mxu0
    %v2097 = vadd.f32 %v2048, %v2096
    %2098 = vmatmul.bf16.gmra.mxu0 %v654
    %v2099 = vpop.f32.mrf.mxu0
    %v2100 = vadd.f32 %v2051, %v2099
    %v2101 = vpop.f32.mrf.mxu0
    %v2102 = vadd.f32 %v2053, %v2101
    %2103 = vmatmul.bf16.gmra.mxu0 %v662
    %v2104 = vpop.f32.mrf.mxu0
    %v2105 = vadd.f32 %v2056, %v2104
    %v2106 = vpop.f32.mrf.mxu0
    %v2107 = vadd.f32 %v2058, %v2106
    %2108 = vmatmul.bf16.gmra.mxu0 %v670
    %v2109 = vpop.f32.mrf.mxu0
    %v2110 = vadd.f32 %v2061, %v2109
    %v2111 = vpop.f32.mrf.mxu0
    %v2112 = vadd.f32 %v2063, %v2111
    %2113 = vmatmul.bf16.gmra.mxu0 %v678
    %v2114 = vpop.f32.mrf.mxu0
    %v2115 = vadd.f32 %v2066, %v2114
    %v2116 = vpop.f32.mrf.mxu0
    %v2117 = vadd.f32 %v2068, %v2116
    %2118 = vdwg.mxu0
    %2119 = vmatpush.bf16.msra.mxu0 %v1681
    %2120 = vmatpush.bf16.msra.mxu0 %v1678
    %2121 = vmatpush.bf16.msra.mxu0 %v1675
    %2122 = vmatpush.bf16.msra.mxu0 %v1672
    %2123 = vmatpush.bf16.msra.mxu0 %v1669
    %2124 = vmatpush.bf16.msra.mxu0 %v1666
    %2125 = vmatpush.bf16.msra.mxu0 %v1663
    %2126 = vmatpush.bf16.msra.mxu0 %v1660
    %2127 = vmatmul.bf16.gmra.mxu0 %v623
    %v2128 = vpop.f32.mrf.mxu0
    %v2129 = vadd.f32 %v2080, %v2128
    %v2130 = vpop.f32.mrf.mxu0
    %v2131 = vadd.f32 %v2082, %v2130
    %2132 = vmatmul.bf16.gmra.mxu0 %v631
    %v2133 = vpop.f32.mrf.mxu0
    %v2134 = vadd.f32 %v2085, %v2133
    %v2135 = vpop.f32.mrf.mxu0
    %v2136 = vadd.f32 %v2087, %v2135
    %2137 = vmatmul.bf16.gmra.mxu0 %v639
    %v2138 = vpop.f32.mrf.mxu0
    %v2139 = vadd.f32 %v2090, %v2138
    %v2140 = vpop.f32.mrf.mxu0
    %v2141 = vadd.f32 %v2092, %v2140
    %2142 = vmatmul.bf16.gmra.mxu0 %v647
    %v2143 = vpop.f32.mrf.mxu0
    %v2144 = vadd.f32 %v2095, %v2143
    %v2145 = vpop.f32.mrf.mxu0
    %v2146 = vadd.f32 %v2097, %v2145
    %2147 = vmatmul.bf16.gmra.mxu0 %v655
    %v2148 = vpop.f32.mrf.mxu0
    %v2149 = vadd.f32 %v2100, %v2148
    %v2150 = vpop.f32.mrf.mxu0
    %v2151 = vadd.f32 %v2102, %v2150
    %2152 = vmatmul.bf16.gmra.mxu0 %v663
    %v2153 = vpop.f32.mrf.mxu0
    %v2154 = vadd.f32 %v2105, %v2153
    %v2155 = vpop.f32.mrf.mxu0
    %v2156 = vadd.f32 %v2107, %v2155
    %2157 = vmatmul.bf16.gmra.mxu0 %v671
    %v2158 = vpop.f32.mrf.mxu0
    %v2159 = vadd.f32 %v2110, %v2158
    %v2160 = vpop.f32.mrf.mxu0
    %v2161 = vadd.f32 %v2112, %v2160
    %2162 = vmatmul.bf16.gmra.mxu0 %v679
    %v2163 = vpop.f32.mrf.mxu0
    %v2164 = vadd.f32 %v2115, %v2163
    %v2165 = vpop.f32.mrf.mxu0
    %v2166 = vadd.f32 %v2117, %v2165
    %2167 = vdwg.mxu0
    %2168 = vmatpush.bf16.msra.mxu0 %v1705
    %2169 = vmatpush.bf16.msra.mxu0 %v1702
    %2170 = vmatpush.bf16.msra.mxu0 %v1699
    %2171 = vmatpush.bf16.msra.mxu0 %v1696
    %2172 = vmatpush.bf16.msra.mxu0 %v1693
    %2173 = vmatpush.bf16.msra.mxu0 %v1690
    %2174 = vmatpush.bf16.msra.mxu0 %v1687
    %2175 = vmatpush.bf16.msra.mxu0 %v1684
    %2176 = vmatmul.bf16.gmra.mxu0 %v624
    %v2177 = vpop.f32.mrf.mxu0
    %v2178 = vadd.f32 %v2129, %v2177
    %v2179 = vpop.f32.mrf.mxu0
    %v2180 = vadd.f32 %v2131, %v2179
    %2181 = vmatmul.bf16.gmra.mxu0 %v632
    %v2182 = vpop.f32.mrf.mxu0
    %v2183 = vadd.f32 %v2134, %v2182
    %v2184 = vpop.f32.mrf.mxu0
    %v2185 = vadd.f32 %v2136, %v2184
    %2186 = vmatmul.bf16.gmra.mxu0 %v640
    %v2187 = vpop.f32.mrf.mxu0
    %v2188 = vadd.f32 %v2139, %v2187
    %v2189 = vpop.f32.mrf.mxu0
    %v2190 = vadd.f32 %v2141, %v2189
    %2191 = vmatmul.bf16.gmra.mxu0 %v648
    %v2192 = vpop.f32.mrf.mxu0
    %v2193 = vadd.f32 %v2144, %v2192
    %v2194 = vpop.f32.mrf.mxu0
    %v2195 = vadd.f32 %v2146, %v2194
    %2196 = vmatmul.bf16.gmra.mxu0 %v656
    %v2197 = vpop.f32.mrf.mxu0
    %v2198 = vadd.f32 %v2149, %v2197
    %v2199 = vpop.f32.mrf.mxu0
    %v2200 = vadd.f32 %v2151, %v2199
    %2201 = vmatmul.bf16.gmra.mxu0 %v664
    %v2202 = vpop.f32.mrf.mxu0
    %v2203 = vadd.f32 %v2154, %v2202
    %v2204 = vpop.f32.mrf.mxu0
    %v2205 = vadd.f32 %v2156, %v2204
    %2206 = vmatmul.bf16.gmra.mxu0 %v672
    %v2207 = vpop.f32.mrf.mxu0
    %v2208 = vadd.f32 %v2159, %v2207
    %v2209 = vpop.f32.mrf.mxu0
    %v2210 = vadd.f32 %v2161, %v2209
    %2211 = vmatmul.bf16.gmra.mxu0 %v680
    %v2212 = vpop.f32.mrf.mxu0
    %v2213 = vadd.f32 %v2164, %v2212
    %v2214 = vpop.f32.mrf.mxu0
    %v2215 = vadd.f32 %v2166, %v2214
    %2216 = vdwg.mxu0
    %2217 = vmatpush.bf16.msra.mxu0 %v1729
    %2218 = vmatpush.bf16.msra.mxu0 %v1726
    %2219 = vmatpush.bf16.msra.mxu0 %v1723
    %2220 = vmatpush.bf16.msra.mxu0 %v1720
    %2221 = vmatpush.bf16.msra.mxu0 %v1717
    %2222 = vmatpush.bf16.msra.mxu0 %v1714
    %2223 = vmatpush.bf16.msra.mxu0 %v1711
    %2224 = vmatpush.bf16.msra.mxu0 %v1708
    %2225 = vmatmul.bf16.gmra.mxu0 %v625
    %v2226 = vpop.f32.mrf.mxu0
    %v2227 = vadd.f32 %v2178, %v2226
    %v2228 = vpop.f32.mrf.mxu0
    %v2229 = vadd.f32 %v2180, %v2228
    %2230 = vmatmul.bf16.gmra.mxu0 %v633
    %v2231 = vpop.f32.mrf.mxu0
    %v2232 = vadd.f32 %v2183, %v2231
    %v2233 = vpop.f32.mrf.mxu0
    %v2234 = vadd.f32 %v2185, %v2233
    %2235 = vmatmul.bf16.gmra.mxu0 %v641
    %v2236 = vpop.f32.mrf.mxu0
    %v2237 = vadd.f32 %v2188, %v2236
    %v2238 = vpop.f32.mrf.mxu0
    %v2239 = vadd.f32 %v2190, %v2238
    %2240 = vmatmul.bf16.gmra.mxu0 %v649
    %v2241 = vpop.f32.mrf.mxu0
    %v2242 = vadd.f32 %v2193, %v2241
    %v2243 = vpop.f32.mrf.mxu0
    %v2244 = vadd.f32 %v2195, %v2243
    %2245 = vmatmul.bf16.gmra.mxu0 %v657
    %v2246 = vpop.f32.mrf.mxu0
    %v2247 = vadd.f32 %v2198, %v2246
    %v2248 = vpop.f32.mrf.mxu0
    %v2249 = vadd.f32 %v2200, %v2248
    %2250 = vmatmul.bf16.gmra.mxu0 %v665
    %v2251 = vpop.f32.mrf.mxu0
    %v2252 = vadd.f32 %v2203, %v2251
    %v2253 = vpop.f32.mrf.mxu0
    %v2254 = vadd.f32 %v2205, %v2253
    %2255 = vmatmul.bf16.gmra.mxu0 %v673
    %v2256 = vpop.f32.mrf.mxu0
    %v2257 = vadd.f32 %v2208, %v2256
    %v2258 = vpop.f32.mrf.mxu0
    %v2259 = vadd.f32 %v2210, %v2258
    %2260 = vmatmul.bf16.gmra.mxu0 %v681
    %v2261 = vpop.f32.mrf.mxu0
    %v2262 = vadd.f32 %v2213, %v2261
    %v2263 = vpop.f32.mrf.mxu0
    %v2264 = vadd.f32 %v2215, %v2263
    %2265 = vdwg.mxu0
    %2266 = vmatpush.bf16.msra.mxu0 %v1753
    %2267 = vmatpush.bf16.msra.mxu0 %v1750
    %2268 = vmatpush.bf16.msra.mxu0 %v1747
    %2269 = vmatpush.bf16.msra.mxu0 %v1744
    %2270 = vmatpush.bf16.msra.mxu0 %v1741
    %2271 = vmatpush.bf16.msra.mxu0 %v1738
    %2272 = vmatpush.bf16.msra.mxu0 %v1735
    %2273 = vmatpush.bf16.msra.mxu0 %v1732
    %2274 = vmatmul.bf16.gmra.mxu0 %v626
    %v2275 = vpop.f32.mrf.mxu0
    %v2276 = vadd.f32 %v2227, %v2275
    %v2277 = vpop.f32.mrf.mxu0
    %v2278 = vadd.f32 %v2229, %v2277
    %2279 = vmatmul.bf16.gmra.mxu0 %v634
    %v2280 = vpop.f32.mrf.mxu0
    %v2281 = vadd.f32 %v2232, %v2280
    %v2282 = vpop.f32.mrf.mxu0
    %v2283 = vadd.f32 %v2234, %v2282
    %2284 = vmatmul.bf16.gmra.mxu0 %v642
    %v2285 = vpop.f32.mrf.mxu0
    %v2286 = vadd.f32 %v2237, %v2285
    %v2287 = vpop.f32.mrf.mxu0
    %v2288 = vadd.f32 %v2239, %v2287
    %2289 = vmatmul.bf16.gmra.mxu0 %v650
    %v2290 = vpop.f32.mrf.mxu0
    %v2291 = vadd.f32 %v2242, %v2290
    %v2292 = vpop.f32.mrf.mxu0
    %v2293 = vadd.f32 %v2244, %v2292
    %2294 = vmatmul.bf16.gmra.mxu0 %v658
    %v2295 = vpop.f32.mrf.mxu0
    %v2296 = vadd.f32 %v2247, %v2295
    %v2297 = vpop.f32.mrf.mxu0
    %v2298 = vadd.f32 %v2249, %v2297
    %2299 = vmatmul.bf16.gmra.mxu0 %v666
    %v2300 = vpop.f32.mrf.mxu0
    %v2301 = vadd.f32 %v2252, %v2300
    %v2302 = vpop.f32.mrf.mxu0
    %v2303 = vadd.f32 %v2254, %v2302
    %2304 = vmatmul.bf16.gmra.mxu0 %v674
    %v2305 = vpop.f32.mrf.mxu0
    %v2306 = vadd.f32 %v2257, %v2305
    %v2307 = vpop.f32.mrf.mxu0
    %v2308 = vadd.f32 %v2259, %v2307
    %2309 = vmatmul.bf16.gmra.mxu0 %v682
    %v2310 = vpop.f32.mrf.mxu0
    %v2311 = vadd.f32 %v2262, %v2310
    %v2312 = vpop.f32.mrf.mxu0
    %v2313 = vadd.f32 %v2264, %v2312
    %2314 = vdwg.mxu0
    %2315 = vmatpush.bf16.msra.mxu0 %v1777
    %2316 = vmatpush.bf16.msra.mxu0 %v1774
    %2317 = vmatpush.bf16.msra.mxu0 %v1771
    %2318 = vmatpush.bf16.msra.mxu0 %v1768
    %2319 = vmatpush.bf16.msra.mxu0 %v1765
    %2320 = vmatpush.bf16.msra.mxu0 %v1762
    %2321 = vmatpush.bf16.msra.mxu0 %v1759
    %2322 = vmatpush.bf16.msra.mxu0 %v1756
    %2323 = vmatmul.bf16.gmra.mxu0 %v627
    %v2324 = vpop.f32.mrf.mxu0
    %v2325 = vadd.f32 %v2276, %v2324
    %v2326 = vpop.f32.mrf.mxu0
    %v2327 = vadd.f32 %v2278, %v2326
    %2328 = vmatmul.bf16.gmra.mxu0 %v635
    %v2329 = vpop.f32.mrf.mxu0
    %v2330 = vadd.f32 %v2281, %v2329
    %v2331 = vpop.f32.mrf.mxu0
    %v2332 = vadd.f32 %v2283, %v2331
    %2333 = vmatmul.bf16.gmra.mxu0 %v643
    %v2334 = vpop.f32.mrf.mxu0
    %v2335 = vadd.f32 %v2286, %v2334
    %v2336 = vpop.f32.mrf.mxu0
    %v2337 = vadd.f32 %v2288, %v2336
    %2338 = vmatmul.bf16.gmra.mxu0 %v651
    %v2339 = vpop.f32.mrf.mxu0
    %v2340 = vadd.f32 %v2291, %v2339
    %v2341 = vpop.f32.mrf.mxu0
    %v2342 = vadd.f32 %v2293, %v2341
    %2343 = vmatmul.bf16.gmra.mxu0 %v659
    %v2344 = vpop.f32.mrf.mxu0
    %v2345 = vadd.f32 %v2296, %v2344
    %v2346 = vpop.f32.mrf.mxu0
    %v2347 = vadd.f32 %v2298, %v2346
    %2348 = vmatmul.bf16.gmra.mxu0 %v667
    %v2349 = vpop.f32.mrf.mxu0
    %v2350 = vadd.f32 %v2301, %v2349
    %v2351 = vpop.f32.mrf.mxu0
    %v2352 = vadd.f32 %v2303, %v2351
    %2353 = vmatmul.bf16.gmra.mxu0 %v675
    %v2354 = vpop.f32.mrf.mxu0
    %v2355 = vadd.f32 %v2306, %v2354
    %v2356 = vpop.f32.mrf.mxu0
    %v2357 = vadd.f32 %v2308, %v2356
    %2358 = vmatmul.bf16.gmra.mxu0 %v683
    %v2359 = vpop.f32.mrf.mxu0
    %v2360 = vadd.f32 %v2311, %v2359
    %v2361 = vpop.f32.mrf.mxu0
    %v2362 = vadd.f32 %v2313, %v2361
    %2363 = vdwg.mxu0
    %2364 = vmatpush.bf16.msra.mxu0 %v1610
    %2365 = vmatpush.bf16.msra.mxu0 %v1607
    %2366 = vmatpush.bf16.msra.mxu0 %v1604
    %2367 = vmatpush.bf16.msra.mxu0 %v1601
    %2368 = vmatpush.bf16.msra.mxu0 %v1598
    %2369 = vmatpush.bf16.msra.mxu0 %v1595
    %2370 = vmatpush.bf16.msra.mxu0 %v1592
    %2371 = vmatpush.bf16.msra.mxu0 %v1589
    %2372 = vmatmul.bf16.gmra.mxu0 %v620
    %v2373 = vpop.f32.mrf.mxu0
    %v2374 = vadd.f32 %v943, %v2373
    %v2375 = vpop.f32.mrf.mxu0
    %v2376 = vadd.f32 %v943, %v2375
    %2377 = vmatmul.bf16.gmra.mxu0 %v628
    %v2378 = vpop.f32.mrf.mxu0
    %v2379 = vadd.f32 %v943, %v2378
    %v2380 = vpop.f32.mrf.mxu0
    %v2381 = vadd.f32 %v943, %v2380
    %2382 = vmatmul.bf16.gmra.mxu0 %v636
    %v2383 = vpop.f32.mrf.mxu0
    %v2384 = vadd.f32 %v943, %v2383
    %v2385 = vpop.f32.mrf.mxu0
    %v2386 = vadd.f32 %v943, %v2385
    %2387 = vmatmul.bf16.gmra.mxu0 %v644
    %v2388 = vpop.f32.mrf.mxu0
    %v2389 = vadd.f32 %v943, %v2388
    %v2390 = vpop.f32.mrf.mxu0
    %v2391 = vadd.f32 %v943, %v2390
    %2392 = vmatmul.bf16.gmra.mxu0 %v652
    %v2393 = vpop.f32.mrf.mxu0
    %v2394 = vadd.f32 %v943, %v2393
    %v2395 = vpop.f32.mrf.mxu0
    %v2396 = vadd.f32 %v943, %v2395
    %2397 = vmatmul.bf16.gmra.mxu0 %v660
    %v2398 = vpop.f32.mrf.mxu0
    %v2399 = vadd.f32 %v943, %v2398
    %v2400 = vpop.f32.mrf.mxu0
    %v2401 = vadd.f32 %v943, %v2400
    %2402 = vmatmul.bf16.gmra.mxu0 %v668
    %v2403 = vpop.f32.mrf.mxu0
    %v2404 = vadd.f32 %v943, %v2403
    %v2405 = vpop.f32.mrf.mxu0
    %v2406 = vadd.f32 %v943, %v2405
    %2407 = vmatmul.bf16.gmra.mxu0 %v676
    %v2408 = vpop.f32.mrf.mxu0
    %v2409 = vadd.f32 %v943, %v2408
    %v2410 = vpop.f32.mrf.mxu0
    %v2411 = vadd.f32 %v943, %v2410
    %2412 = vdwg.mxu0
    %2413 = vmatpush.bf16.msra.mxu0 %v1634
    %2414 = vmatpush.bf16.msra.mxu0 %v1631
    %2415 = vmatpush.bf16.msra.mxu0 %v1628
    %2416 = vmatpush.bf16.msra.mxu0 %v1625
    %2417 = vmatpush.bf16.msra.mxu0 %v1622
    %2418 = vmatpush.bf16.msra.mxu0 %v1619
    %2419 = vmatpush.bf16.msra.mxu0 %v1616
    %2420 = vmatpush.bf16.msra.mxu0 %v1613
    %2421 = vmatmul.bf16.gmra.mxu0 %v621
    %v2422 = vpop.f32.mrf.mxu0
    %v2423 = vadd.f32 %v2374, %v2422
    %v2424 = vpop.f32.mrf.mxu0
    %v2425 = vadd.f32 %v2376, %v2424
    %2426 = vmatmul.bf16.gmra.mxu0 %v629
    %v2427 = vpop.f32.mrf.mxu0
    %v2428 = vadd.f32 %v2379, %v2427
    %v2429 = vpop.f32.mrf.mxu0
    %v2430 = vadd.f32 %v2381, %v2429
    %2431 = vmatmul.bf16.gmra.mxu0 %v637
    %v2432 = vpop.f32.mrf.mxu0
    %v2433 = vadd.f32 %v2384, %v2432
    %v2434 = vpop.f32.mrf.mxu0
    %v2435 = vadd.f32 %v2386, %v2434
    %2436 = vmatmul.bf16.gmra.mxu0 %v645
    %v2437 = vpop.f32.mrf.mxu0
    %v2438 = vadd.f32 %v2389, %v2437
    %v2439 = vpop.f32.mrf.mxu0
    %v2440 = vadd.f32 %v2391, %v2439
    %2441 = vmatmul.bf16.gmra.mxu0 %v653
    %v2442 = vpop.f32.mrf.mxu0
    %v2443 = vadd.f32 %v2394, %v2442
    %v2444 = vpop.f32.mrf.mxu0
    %v2445 = vadd.f32 %v2396, %v2444
    %2446 = vmatmul.bf16.gmra.mxu0 %v661
    %v2447 = vpop.f32.mrf.mxu0
    %v2448 = vadd.f32 %v2399, %v2447
    %v2449 = vpop.f32.mrf.mxu0
    %v2450 = vadd.f32 %v2401, %v2449
    %2451 = vmatmul.bf16.gmra.mxu0 %v669
    %v2452 = vpop.f32.mrf.mxu0
    %v2453 = vadd.f32 %v2404, %v2452
    %v2454 = vpop.f32.mrf.mxu0
    %v2455 = vadd.f32 %v2406, %v2454
    %2456 = vmatmul.bf16.gmra.mxu0 %v677
    %v2457 = vpop.f32.mrf.mxu0
    %v2458 = vadd.f32 %v2409, %v2457
    %v2459 = vpop.f32.mrf.mxu0
    %v2460 = vadd.f32 %v2411, %v2459
    %2461 = vdwg.mxu0
    %2462 = vmatpush.bf16.msra.mxu0 %v1658
    %2463 = vmatpush.bf16.msra.mxu0 %v1655
    %2464 = vmatpush.bf16.msra.mxu0 %v1652
    %2465 = vmatpush.bf16.msra.mxu0 %v1649
    %2466 = vmatpush.bf16.msra.mxu0 %v1646
    %2467 = vmatpush.bf16.msra.mxu0 %v1643
    %2468 = vmatpush.bf16.msra.mxu0 %v1640
    %2469 = vmatpush.bf16.msra.mxu0 %v1637
    %2470 = vmatmul.bf16.gmra.mxu0 %v622
    %v2471 = vpop.f32.mrf.mxu0
    %v2472 = vadd.f32 %v2423, %v2471
    %v2473 = vpop.f32.mrf.mxu0
    %v2474 = vadd.f32 %v2425, %v2473
    %2475 = vmatmul.bf16.gmra.mxu0 %v630
    %v2476 = vpop.f32.mrf.mxu0
    %v2477 = vadd.f32 %v2428, %v2476
    %v2478 = vpop.f32.mrf.mxu0
    %v2479 = vadd.f32 %v2430, %v2478
    %2480 = vmatmul.bf16.gmra.mxu0 %v638
    %v2481 = vpop.f32.mrf.mxu0
    %v2482 = vadd.f32 %v2433, %v2481
    %v2483 = vpop.f32.mrf.mxu0
    %v2484 = vadd.f32 %v2435, %v2483
    %2485 = vmatmul.bf16.gmra.mxu0 %v646
    %v2486 = vpop.f32.mrf.mxu0
    %v2487 = vadd.f32 %v2438, %v2486
    %v2488 = vpop.f32.mrf.mxu0
    %v2489 = vadd.f32 %v2440, %v2488
    %2490 = vmatmul.bf16.gmra.mxu0 %v654
    %v2491 = vpop.f32.mrf.mxu0
    %v2492 = vadd.f32 %v2443, %v2491
    %v2493 = vpop.f32.mrf.mxu0
    %v2494 = vadd.f32 %v2445, %v2493
    %2495 = vmatmul.bf16.gmra.mxu0 %v662
    %v2496 = vpop.f32.mrf.mxu0
    %v2497 = vadd.f32 %v2448, %v2496
    %v2498 = vpop.f32.mrf.mxu0
    %v2499 = vadd.f32 %v2450, %v2498
    %2500 = vmatmul.bf16.gmra.mxu0 %v670
    %v2501 = vpop.f32.mrf.mxu0
    %v2502 = vadd.f32 %v2453, %v2501
    %v2503 = vpop.f32.mrf.mxu0
    %v2504 = vadd.f32 %v2455, %v2503
    %2505 = vmatmul.bf16.gmra.mxu0 %v678
    %v2506 = vpop.f32.mrf.mxu0
    %v2507 = vadd.f32 %v2458, %v2506
    %v2508 = vpop.f32.mrf.mxu0
    %v2509 = vadd.f32 %v2460, %v2508
    %2510 = vdwg.mxu0
    %2511 = vmatpush.bf16.msra.mxu0 %v1682
    %2512 = vmatpush.bf16.msra.mxu0 %v1679
    %2513 = vmatpush.bf16.msra.mxu0 %v1676
    %2514 = vmatpush.bf16.msra.mxu0 %v1673
    %2515 = vmatpush.bf16.msra.mxu0 %v1670
    %2516 = vmatpush.bf16.msra.mxu0 %v1667
    %2517 = vmatpush.bf16.msra.mxu0 %v1664
    %2518 = vmatpush.bf16.msra.mxu0 %v1661
    %2519 = vmatmul.bf16.gmra.mxu0 %v623
    %v2520 = vpop.f32.mrf.mxu0
    %v2521 = vadd.f32 %v2472, %v2520
    %v2522 = vpop.f32.mrf.mxu0
    %v2523 = vadd.f32 %v2474, %v2522
    %2524 = vmatmul.bf16.gmra.mxu0 %v631
    %v2525 = vpop.f32.mrf.mxu0
    %v2526 = vadd.f32 %v2477, %v2525
    %v2527 = vpop.f32.mrf.mxu0
    %v2528 = vadd.f32 %v2479, %v2527
    %2529 = vmatmul.bf16.gmra.mxu0 %v639
    %v2530 = vpop.f32.mrf.mxu0
    %v2531 = vadd.f32 %v2482, %v2530
    %v2532 = vpop.f32.mrf.mxu0
    %v2533 = vadd.f32 %v2484, %v2532
    %2534 = vmatmul.bf16.gmra.mxu0 %v647
    %v2535 = vpop.f32.mrf.mxu0
    %v2536 = vadd.f32 %v2487, %v2535
    %v2537 = vpop.f32.mrf.mxu0
    %v2538 = vadd.f32 %v2489, %v2537
    %2539 = vmatmul.bf16.gmra.mxu0 %v655
    %v2540 = vpop.f32.mrf.mxu0
    %v2541 = vadd.f32 %v2492, %v2540
    %v2542 = vpop.f32.mrf.mxu0
    %v2543 = vadd.f32 %v2494, %v2542
    %2544 = vmatmul.bf16.gmra.mxu0 %v663
    %v2545 = vpop.f32.mrf.mxu0
    %v2546 = vadd.f32 %v2497, %v2545
    %v2547 = vpop.f32.mrf.mxu0
    %v2548 = vadd.f32 %v2499, %v2547
    %2549 = vmatmul.bf16.gmra.mxu0 %v671
    %v2550 = vpop.f32.mrf.mxu0
    %v2551 = vadd.f32 %v2502, %v2550
    %v2552 = vpop.f32.mrf.mxu0
    %v2553 = vadd.f32 %v2504, %v2552
    %2554 = vmatmul.bf16.gmra.mxu0 %v679
    %v2555 = vpop.f32.mrf.mxu0
    %v2556 = vadd.f32 %v2507, %v2555
    %v2557 = vpop.f32.mrf.mxu0
    %v2558 = vadd.f32 %v2509, %v2557
    %2559 = vdwg.mxu0
    %2560 = vmatpush.bf16.msra.mxu0 %v1706
    %2561 = vmatpush.bf16.msra.mxu0 %v1703
    %2562 = vmatpush.bf16.msra.mxu0 %v1700
    %2563 = vmatpush.bf16.msra.mxu0 %v1697
    %2564 = vmatpush.bf16.msra.mxu0 %v1694
    %2565 = vmatpush.bf16.msra.mxu0 %v1691
    %2566 = vmatpush.bf16.msra.mxu0 %v1688
    %2567 = vmatpush.bf16.msra.mxu0 %v1685
    %2568 = vmatmul.bf16.gmra.mxu0 %v624
    %v2569 = vpop.f32.mrf.mxu0
    %v2570 = vadd.f32 %v2521, %v2569
    %v2571 = vpop.f32.mrf.mxu0
    %v2572 = vadd.f32 %v2523, %v2571
    %2573 = vmatmul.bf16.gmra.mxu0 %v632
    %v2574 = vpop.f32.mrf.mxu0
    %v2575 = vadd.f32 %v2526, %v2574
    %v2576 = vpop.f32.mrf.mxu0
    %v2577 = vadd.f32 %v2528, %v2576
    %2578 = vmatmul.bf16.gmra.mxu0 %v640
    %v2579 = vpop.f32.mrf.mxu0
    %v2580 = vadd.f32 %v2531, %v2579
    %v2581 = vpop.f32.mrf.mxu0
    %v2582 = vadd.f32 %v2533, %v2581
    %2583 = vmatmul.bf16.gmra.mxu0 %v648
    %v2584 = vpop.f32.mrf.mxu0
    %v2585 = vadd.f32 %v2536, %v2584
    %v2586 = vpop.f32.mrf.mxu0
    %v2587 = vadd.f32 %v2538, %v2586
    %2588 = vmatmul.bf16.gmra.mxu0 %v656
    %v2589 = vpop.f32.mrf.mxu0
    %v2590 = vadd.f32 %v2541, %v2589
    %v2591 = vpop.f32.mrf.mxu0
    %v2592 = vadd.f32 %v2543, %v2591
    %2593 = vmatmul.bf16.gmra.mxu0 %v664
    %v2594 = vpop.f32.mrf.mxu0
    %v2595 = vadd.f32 %v2546, %v2594
    %v2596 = vpop.f32.mrf.mxu0
    %v2597 = vadd.f32 %v2548, %v2596
    %2598 = vmatmul.bf16.gmra.mxu0 %v672
    %v2599 = vpop.f32.mrf.mxu0
    %v2600 = vadd.f32 %v2551, %v2599
    %v2601 = vpop.f32.mrf.mxu0
    %v2602 = vadd.f32 %v2553, %v2601
    %2603 = vmatmul.bf16.gmra.mxu0 %v680
    %v2604 = vpop.f32.mrf.mxu0
    %v2605 = vadd.f32 %v2556, %v2604
    %v2606 = vpop.f32.mrf.mxu0
    %v2607 = vadd.f32 %v2558, %v2606
    %2608 = vdwg.mxu0
    %2609 = vmatpush.bf16.msra.mxu0 %v1730
    %2610 = vmatpush.bf16.msra.mxu0 %v1727
    %2611 = vmatpush.bf16.msra.mxu0 %v1724
    %2612 = vmatpush.bf16.msra.mxu0 %v1721
    %2613 = vmatpush.bf16.msra.mxu0 %v1718
    %2614 = vmatpush.bf16.msra.mxu0 %v1715
    %2615 = vmatpush.bf16.msra.mxu0 %v1712
    %2616 = vmatpush.bf16.msra.mxu0 %v1709
    %2617 = vmatmul.bf16.gmra.mxu0 %v625
    %v2618 = vpop.f32.mrf.mxu0
    %v2619 = vadd.f32 %v2570, %v2618
    %v2620 = vpop.f32.mrf.mxu0
    %v2621 = vadd.f32 %v2572, %v2620
    %2622 = vmatmul.bf16.gmra.mxu0 %v633
    %v2623 = vpop.f32.mrf.mxu0
    %v2624 = vadd.f32 %v2575, %v2623
    %v2625 = vpop.f32.mrf.mxu0
    %v2626 = vadd.f32 %v2577, %v2625
    %2627 = vmatmul.bf16.gmra.mxu0 %v641
    %v2628 = vpop.f32.mrf.mxu0
    %v2629 = vadd.f32 %v2580, %v2628
    %v2630 = vpop.f32.mrf.mxu0
    %v2631 = vadd.f32 %v2582, %v2630
    %2632 = vmatmul.bf16.gmra.mxu0 %v649
    %v2633 = vpop.f32.mrf.mxu0
    %v2634 = vadd.f32 %v2585, %v2633
    %v2635 = vpop.f32.mrf.mxu0
    %v2636 = vadd.f32 %v2587, %v2635
    %2637 = vmatmul.bf16.gmra.mxu0 %v657
    %v2638 = vpop.f32.mrf.mxu0
    %v2639 = vadd.f32 %v2590, %v2638
    %v2640 = vpop.f32.mrf.mxu0
    %v2641 = vadd.f32 %v2592, %v2640
    %2642 = vmatmul.bf16.gmra.mxu0 %v665
    %v2643 = vpop.f32.mrf.mxu0
    %v2644 = vadd.f32 %v2595, %v2643
    %v2645 = vpop.f32.mrf.mxu0
    %v2646 = vadd.f32 %v2597, %v2645
    %2647 = vmatmul.bf16.gmra.mxu0 %v673
    %v2648 = vpop.f32.mrf.mxu0
    %v2649 = vadd.f32 %v2600, %v2648
    %v2650 = vpop.f32.mrf.mxu0
    %v2651 = vadd.f32 %v2602, %v2650
    %2652 = vmatmul.bf16.gmra.mxu0 %v681
    %v2653 = vpop.f32.mrf.mxu0
    %v2654 = vadd.f32 %v2605, %v2653
    %v2655 = vpop.f32.mrf.mxu0
    %v2656 = vadd.f32 %v2607, %v2655
    %2657 = vdwg.mxu0
    %2658 = vmatpush.bf16.msra.mxu0 %v1754
    %2659 = vmatpush.bf16.msra.mxu0 %v1751
    %2660 = vmatpush.bf16.msra.mxu0 %v1748
    %2661 = vmatpush.bf16.msra.mxu0 %v1745
    %2662 = vmatpush.bf16.msra.mxu0 %v1742
    %2663 = vmatpush.bf16.msra.mxu0 %v1739
    %2664 = vmatpush.bf16.msra.mxu0 %v1736
    %2665 = vmatpush.bf16.msra.mxu0 %v1733
    %2666 = vmatmul.bf16.gmra.mxu0 %v626
    %v2667 = vpop.f32.mrf.mxu0
    %v2668 = vadd.f32 %v2619, %v2667
    %v2669 = vpop.f32.mrf.mxu0
    %v2670 = vadd.f32 %v2621, %v2669
    %2671 = vmatmul.bf16.gmra.mxu0 %v634
    %v2672 = vpop.f32.mrf.mxu0
    %v2673 = vadd.f32 %v2624, %v2672
    %v2674 = vpop.f32.mrf.mxu0
    %v2675 = vadd.f32 %v2626, %v2674
    %2676 = vmatmul.bf16.gmra.mxu0 %v642
    %v2677 = vpop.f32.mrf.mxu0
    %v2678 = vadd.f32 %v2629, %v2677
    %v2679 = vpop.f32.mrf.mxu0
    %v2680 = vadd.f32 %v2631, %v2679
    %2681 = vmatmul.bf16.gmra.mxu0 %v650
    %v2682 = vpop.f32.mrf.mxu0
    %v2683 = vadd.f32 %v2634, %v2682
    %v2684 = vpop.f32.mrf.mxu0
    %v2685 = vadd.f32 %v2636, %v2684
    %2686 = vmatmul.bf16.gmra.mxu0 %v658
    %v2687 = vpop.f32.mrf.mxu0
    %v2688 = vadd.f32 %v2639, %v2687
    %v2689 = vpop.f32.mrf.mxu0
    %v2690 = vadd.f32 %v2641, %v2689
    %2691 = vmatmul.bf16.gmra.mxu0 %v666
    %v2692 = vpop.f32.mrf.mxu0
    %v2693 = vadd.f32 %v2644, %v2692
    %v2694 = vpop.f32.mrf.mxu0
    %v2695 = vadd.f32 %v2646, %v2694
    %2696 = vmatmul.bf16.gmra.mxu0 %v674
    %v2697 = vpop.f32.mrf.mxu0
    %v2698 = vadd.f32 %v2649, %v2697
    %v2699 = vpop.f32.mrf.mxu0
    %v2700 = vadd.f32 %v2651, %v2699
    %2701 = vmatmul.bf16.gmra.mxu0 %v682
    %v2702 = vpop.f32.mrf.mxu0
    %v2703 = vadd.f32 %v2654, %v2702
    %v2704 = vpop.f32.mrf.mxu0
    %v2705 = vadd.f32 %v2656, %v2704
    %2706 = vdwg.mxu0
    %2707 = vmatpush.bf16.msra.mxu0 %v1778
    %2708 = vmatpush.bf16.msra.mxu0 %v1775
    %2709 = vmatpush.bf16.msra.mxu0 %v1772
    %2710 = vmatpush.bf16.msra.mxu0 %v1769
    %2711 = vmatpush.bf16.msra.mxu0 %v1766
    %2712 = vmatpush.bf16.msra.mxu0 %v1763
    %2713 = vmatpush.bf16.msra.mxu0 %v1760
    %2714 = vmatpush.bf16.msra.mxu0 %v1757
    %2715 = vmatmul.bf16.gmra.mxu0 %v627
    %v2716 = vpop.f32.mrf.mxu0
    %v2717 = vadd.f32 %v2668, %v2716
    %v2718 = vpop.f32.mrf.mxu0
    %v2719 = vadd.f32 %v2670, %v2718
    %2720 = vmatmul.bf16.gmra.mxu0 %v635
    %v2721 = vpop.f32.mrf.mxu0
    %v2722 = vadd.f32 %v2673, %v2721
    %v2723 = vpop.f32.mrf.mxu0
    %v2724 = vadd.f32 %v2675, %v2723
    %2725 = vmatmul.bf16.gmra.mxu0 %v643
    %v2726 = vpop.f32.mrf.mxu0
    %v2727 = vadd.f32 %v2678, %v2726
    %v2728 = vpop.f32.mrf.mxu0
    %v2729 = vadd.f32 %v2680, %v2728
    %2730 = vmatmul.bf16.gmra.mxu0 %v651
    %v2731 = vpop.f32.mrf.mxu0
    %v2732 = vadd.f32 %v2683, %v2731
    %v2733 = vpop.f32.mrf.mxu0
    %v2734 = vadd.f32 %v2685, %v2733
    %2735 = vmatmul.bf16.gmra.mxu0 %v659
    %v2736 = vpop.f32.mrf.mxu0
    %v2737 = vadd.f32 %v2688, %v2736
    %v2738 = vpop.f32.mrf.mxu0
    %v2739 = vadd.f32 %v2690, %v2738
    %2740 = vmatmul.bf16.gmra.mxu0 %v667
    %v2741 = vpop.f32.mrf.mxu0
    %v2742 = vadd.f32 %v2693, %v2741
    %v2743 = vpop.f32.mrf.mxu0
    %v2744 = vadd.f32 %v2695, %v2743
    %2745 = vmatmul.bf16.gmra.mxu0 %v675
    %v2746 = vpop.f32.mrf.mxu0
    %v2747 = vadd.f32 %v2698, %v2746
    %v2748 = vpop.f32.mrf.mxu0
    %v2749 = vadd.f32 %v2700, %v2748
    %2750 = vmatmul.bf16.gmra.mxu0 %v683
    %v2751 = vpop.f32.mrf.mxu0
    %v2752 = vadd.f32 %v2703, %v2751
    %v2753 = vpop.f32.mrf.mxu0
    %v2754 = vadd.f32 %v2705, %v2753
    %2755 = vdwg.mxu0
    %2756 = vmatpush.bf16.msra.mxu0 %v1611
    %2757 = vmatpush.bf16.msra.mxu0 %v1608
    %2758 = vmatpush.bf16.msra.mxu0 %v1605
    %2759 = vmatpush.bf16.msra.mxu0 %v1602
    %2760 = vmatpush.bf16.msra.mxu0 %v1599
    %2761 = vmatpush.bf16.msra.mxu0 %v1596
    %2762 = vmatpush.bf16.msra.mxu0 %v1593
    %2763 = vmatpush.bf16.msra.mxu0 %v1590
    %2764 = vmatmul.bf16.gmra.mxu0 %v620
    %v2765 = vpop.f32.mrf.mxu0
    %v2766 = vadd.f32 %v944, %v2765
    %v2767 = vpop.f32.mrf.mxu0
    %v2768 = vadd.f32 %v944, %v2767
    %2769 = vmatmul.bf16.gmra.mxu0 %v628
    %v2770 = vpop.f32.mrf.mxu0
    %v2771 = vadd.f32 %v944, %v2770
    %v2772 = vpop.f32.mrf.mxu0
    %v2773 = vadd.f32 %v944, %v2772
    %2774 = vmatmul.bf16.gmra.mxu0 %v636
    %v2775 = vpop.f32.mrf.mxu0
    %v2776 = vadd.f32 %v944, %v2775
    %v2777 = vpop.f32.mrf.mxu0
    %v2778 = vadd.f32 %v944, %v2777
    %2779 = vmatmul.bf16.gmra.mxu0 %v644
    %v2780 = vpop.f32.mrf.mxu0
    %v2781 = vadd.f32 %v944, %v2780
    %v2782 = vpop.f32.mrf.mxu0
    %v2783 = vadd.f32 %v944, %v2782
    %2784 = vmatmul.bf16.gmra.mxu0 %v652
    %v2785 = vpop.f32.mrf.mxu0
    %v2786 = vadd.f32 %v944, %v2785
    %v2787 = vpop.f32.mrf.mxu0
    %v2788 = vadd.f32 %v944, %v2787
    %2789 = vmatmul.bf16.gmra.mxu0 %v660
    %v2790 = vpop.f32.mrf.mxu0
    %v2791 = vadd.f32 %v944, %v2790
    %v2792 = vpop.f32.mrf.mxu0
    %v2793 = vadd.f32 %v944, %v2792
    %2794 = vmatmul.bf16.gmra.mxu0 %v668
    %v2795 = vpop.f32.mrf.mxu0
    %v2796 = vadd.f32 %v944, %v2795
    %v2797 = vpop.f32.mrf.mxu0
    %v2798 = vadd.f32 %v944, %v2797
    %2799 = vmatmul.bf16.gmra.mxu0 %v676
    %v2800 = vpop.f32.mrf.mxu0
    %v2801 = vadd.f32 %v944, %v2800
    %v2802 = vpop.f32.mrf.mxu0
    %v2803 = vadd.f32 %v944, %v2802
    %2804 = vdwg.mxu0
    %2805 = vmatpush.bf16.msra.mxu0 %v1635
    %2806 = vmatpush.bf16.msra.mxu0 %v1632
    %2807 = vmatpush.bf16.msra.mxu0 %v1629
    %2808 = vmatpush.bf16.msra.mxu0 %v1626
    %2809 = vmatpush.bf16.msra.mxu0 %v1623
    %2810 = vmatpush.bf16.msra.mxu0 %v1620
    %2811 = vmatpush.bf16.msra.mxu0 %v1617
    %2812 = vmatpush.bf16.msra.mxu0 %v1614
    %2813 = vmatmul.bf16.gmra.mxu0 %v621
    %v2814 = vpop.f32.mrf.mxu0
    %v2815 = vadd.f32 %v2766, %v2814
    %v2816 = vpop.f32.mrf.mxu0
    %v2817 = vadd.f32 %v2768, %v2816
    %2818 = vmatmul.bf16.gmra.mxu0 %v629
    %v2819 = vpop.f32.mrf.mxu0
    %v2820 = vadd.f32 %v2771, %v2819
    %v2821 = vpop.f32.mrf.mxu0
    %v2822 = vadd.f32 %v2773, %v2821
    %2823 = vmatmul.bf16.gmra.mxu0 %v637
    %v2824 = vpop.f32.mrf.mxu0
    %v2825 = vadd.f32 %v2776, %v2824
    %v2826 = vpop.f32.mrf.mxu0
    %v2827 = vadd.f32 %v2778, %v2826
    %2828 = vmatmul.bf16.gmra.mxu0 %v645
    %v2829 = vpop.f32.mrf.mxu0
    %v2830 = vadd.f32 %v2781, %v2829
    %v2831 = vpop.f32.mrf.mxu0
    %v2832 = vadd.f32 %v2783, %v2831
    %2833 = vmatmul.bf16.gmra.mxu0 %v653
    %v2834 = vpop.f32.mrf.mxu0
    %v2835 = vadd.f32 %v2786, %v2834
    %v2836 = vpop.f32.mrf.mxu0
    %v2837 = vadd.f32 %v2788, %v2836
    %2838 = vmatmul.bf16.gmra.mxu0 %v661
    %v2839 = vpop.f32.mrf.mxu0
    %v2840 = vadd.f32 %v2791, %v2839
    %v2841 = vpop.f32.mrf.mxu0
    %v2842 = vadd.f32 %v2793, %v2841
    %2843 = vmatmul.bf16.gmra.mxu0 %v669
    %v2844 = vpop.f32.mrf.mxu0
    %v2845 = vadd.f32 %v2796, %v2844
    %v2846 = vpop.f32.mrf.mxu0
    %v2847 = vadd.f32 %v2798, %v2846
    %2848 = vmatmul.bf16.gmra.mxu0 %v677
    %v2849 = vpop.f32.mrf.mxu0
    %v2850 = vadd.f32 %v2801, %v2849
    %v2851 = vpop.f32.mrf.mxu0
    %v2852 = vadd.f32 %v2803, %v2851
    %2853 = vdwg.mxu0
    %2854 = vmatpush.bf16.msra.mxu0 %v1659
    %2855 = vmatpush.bf16.msra.mxu0 %v1656
    %2856 = vmatpush.bf16.msra.mxu0 %v1653
    %2857 = vmatpush.bf16.msra.mxu0 %v1650
    %2858 = vmatpush.bf16.msra.mxu0 %v1647
    %2859 = vmatpush.bf16.msra.mxu0 %v1644
    %2860 = vmatpush.bf16.msra.mxu0 %v1641
    %2861 = vmatpush.bf16.msra.mxu0 %v1638
    %2862 = vmatmul.bf16.gmra.mxu0 %v622
    %v2863 = vpop.f32.mrf.mxu0
    %v2864 = vadd.f32 %v2815, %v2863
    %v2865 = vpop.f32.mrf.mxu0
    %v2866 = vadd.f32 %v2817, %v2865
    %2867 = vmatmul.bf16.gmra.mxu0 %v630
    %v2868 = vpop.f32.mrf.mxu0
    %v2869 = vadd.f32 %v2820, %v2868
    %v2870 = vpop.f32.mrf.mxu0
    %v2871 = vadd.f32 %v2822, %v2870
    %2872 = vmatmul.bf16.gmra.mxu0 %v638
    %v2873 = vpop.f32.mrf.mxu0
    %v2874 = vadd.f32 %v2825, %v2873
    %v2875 = vpop.f32.mrf.mxu0
    %v2876 = vadd.f32 %v2827, %v2875
    %2877 = vmatmul.bf16.gmra.mxu0 %v646
    %v2878 = vpop.f32.mrf.mxu0
    %v2879 = vadd.f32 %v2830, %v2878
    %v2880 = vpop.f32.mrf.mxu0
    %v2881 = vadd.f32 %v2832, %v2880
    %2882 = vmatmul.bf16.gmra.mxu0 %v654
    %v2883 = vpop.f32.mrf.mxu0
    %v2884 = vadd.f32 %v2835, %v2883
    %v2885 = vpop.f32.mrf.mxu0
    %v2886 = vadd.f32 %v2837, %v2885
    %2887 = vmatmul.bf16.gmra.mxu0 %v662
    %v2888 = vpop.f32.mrf.mxu0
    %v2889 = vadd.f32 %v2840, %v2888
    %v2890 = vpop.f32.mrf.mxu0
    %v2891 = vadd.f32 %v2842, %v2890
    %2892 = vmatmul.bf16.gmra.mxu0 %v670
    %v2893 = vpop.f32.mrf.mxu0
    %v2894 = vadd.f32 %v2845, %v2893
    %v2895 = vpop.f32.mrf.mxu0
    %v2896 = vadd.f32 %v2847, %v2895
    %2897 = vmatmul.bf16.gmra.mxu0 %v678
    %v2898 = vpop.f32.mrf.mxu0
    %v2899 = vadd.f32 %v2850, %v2898
    %v2900 = vpop.f32.mrf.mxu0
    %v2901 = vadd.f32 %v2852, %v2900
    %2902 = vdwg.mxu0
    %2903 = vmatpush.bf16.msra.mxu0 %v1683
    %2904 = vmatpush.bf16.msra.mxu0 %v1680
    %2905 = vmatpush.bf16.msra.mxu0 %v1677
    %2906 = vmatpush.bf16.msra.mxu0 %v1674
    %2907 = vmatpush.bf16.msra.mxu0 %v1671
    %2908 = vmatpush.bf16.msra.mxu0 %v1668
    %2909 = vmatpush.bf16.msra.mxu0 %v1665
    %2910 = vmatpush.bf16.msra.mxu0 %v1662
    %2911 = vmatmul.bf16.gmra.mxu0 %v623
    %v2912 = vpop.f32.mrf.mxu0
    %v2913 = vadd.f32 %v2864, %v2912
    %v2914 = vpop.f32.mrf.mxu0
    %v2915 = vadd.f32 %v2866, %v2914
    %2916 = vmatmul.bf16.gmra.mxu0 %v631
    %v2917 = vpop.f32.mrf.mxu0
    %v2918 = vadd.f32 %v2869, %v2917
    %v2919 = vpop.f32.mrf.mxu0
    %v2920 = vadd.f32 %v2871, %v2919
    %2921 = vmatmul.bf16.gmra.mxu0 %v639
    %v2922 = vpop.f32.mrf.mxu0
    %v2923 = vadd.f32 %v2874, %v2922
    %v2924 = vpop.f32.mrf.mxu0
    %v2925 = vadd.f32 %v2876, %v2924
    %2926 = vmatmul.bf16.gmra.mxu0 %v647
    %v2927 = vpop.f32.mrf.mxu0
    %v2928 = vadd.f32 %v2879, %v2927
    %v2929 = vpop.f32.mrf.mxu0
    %v2930 = vadd.f32 %v2881, %v2929
    %2931 = vmatmul.bf16.gmra.mxu0 %v655
    %v2932 = vpop.f32.mrf.mxu0
    %v2933 = vadd.f32 %v2884, %v2932
    %v2934 = vpop.f32.mrf.mxu0
    %v2935 = vadd.f32 %v2886, %v2934
    %2936 = vmatmul.bf16.gmra.mxu0 %v663
    %v2937 = vpop.f32.mrf.mxu0
    %v2938 = vadd.f32 %v2889, %v2937
    %v2939 = vpop.f32.mrf.mxu0
    %v2940 = vadd.f32 %v2891, %v2939
    %2941 = vmatmul.bf16.gmra.mxu0 %v671
    %v2942 = vpop.f32.mrf.mxu0
    %v2943 = vadd.f32 %v2894, %v2942
    %v2944 = vpop.f32.mrf.mxu0
    %v2945 = vadd.f32 %v2896, %v2944
    %2946 = vmatmul.bf16.gmra.mxu0 %v679
    %v2947 = vpop.f32.mrf.mxu0
    %v2948 = vadd.f32 %v2899, %v2947
    %v2949 = vpop.f32.mrf.mxu0
    %v2950 = vadd.f32 %v2901, %v2949
    %2951 = vdwg.mxu0
    %2952 = vmatpush.bf16.msra.mxu0 %v1707
    %2953 = vmatpush.bf16.msra.mxu0 %v1704
    %2954 = vmatpush.bf16.msra.mxu0 %v1701
    %2955 = vmatpush.bf16.msra.mxu0 %v1698
    %2956 = vmatpush.bf16.msra.mxu0 %v1695
    %2957 = vmatpush.bf16.msra.mxu0 %v1692
    %2958 = vmatpush.bf16.msra.mxu0 %v1689
    %2959 = vmatpush.bf16.msra.mxu0 %v1686
    %2960 = vmatmul.bf16.gmra.mxu0 %v624
    %v2961 = vpop.f32.mrf.mxu0
    %v2962 = vadd.f32 %v2913, %v2961
    %v2963 = vpop.f32.mrf.mxu0
    %v2964 = vadd.f32 %v2915, %v2963
    %2965 = vmatmul.bf16.gmra.mxu0 %v632
    %v2966 = vpop.f32.mrf.mxu0
    %v2967 = vadd.f32 %v2918, %v2966
    %v2968 = vpop.f32.mrf.mxu0
    %v2969 = vadd.f32 %v2920, %v2968
    %2970 = vmatmul.bf16.gmra.mxu0 %v640
    %v2971 = vpop.f32.mrf.mxu0
    %v2972 = vadd.f32 %v2923, %v2971
    %v2973 = vpop.f32.mrf.mxu0
    %v2974 = vadd.f32 %v2925, %v2973
    %2975 = vmatmul.bf16.gmra.mxu0 %v648
    %v2976 = vpop.f32.mrf.mxu0
    %v2977 = vadd.f32 %v2928, %v2976
    %v2978 = vpop.f32.mrf.mxu0
    %v2979 = vadd.f32 %v2930, %v2978
    %2980 = vmatmul.bf16.gmra.mxu0 %v656
    %v2981 = vpop.f32.mrf.mxu0
    %v2982 = vadd.f32 %v2933, %v2981
    %v2983 = vpop.f32.mrf.mxu0
    %v2984 = vadd.f32 %v2935, %v2983
    %2985 = vmatmul.bf16.gmra.mxu0 %v664
    %v2986 = vpop.f32.mrf.mxu0
    %v2987 = vadd.f32 %v2938, %v2986
    %v2988 = vpop.f32.mrf.mxu0
    %v2989 = vadd.f32 %v2940, %v2988
    %2990 = vmatmul.bf16.gmra.mxu0 %v672
    %v2991 = vpop.f32.mrf.mxu0
    %v2992 = vadd.f32 %v2943, %v2991
    %v2993 = vpop.f32.mrf.mxu0
    %v2994 = vadd.f32 %v2945, %v2993
    %2995 = vmatmul.bf16.gmra.mxu0 %v680
    %v2996 = vpop.f32.mrf.mxu0
    %v2997 = vadd.f32 %v2948, %v2996
    %v2998 = vpop.f32.mrf.mxu0
    %v2999 = vadd.f32 %v2950, %v2998
    %3000 = vdwg.mxu0
    %3001 = vmatpush.bf16.msra.mxu0 %v1731
    %3002 = vmatpush.bf16.msra.mxu0 %v1728
    %3003 = vmatpush.bf16.msra.mxu0 %v1725
    %3004 = vmatpush.bf16.msra.mxu0 %v1722
    %3005 = vmatpush.bf16.msra.mxu0 %v1719
    %3006 = vmatpush.bf16.msra.mxu0 %v1716
    %3007 = vmatpush.bf16.msra.mxu0 %v1713
    %3008 = vmatpush.bf16.msra.mxu0 %v1710
    %3009 = vmatmul.bf16.gmra.mxu0 %v625
    %v3010 = vpop.f32.mrf.mxu0
    %v3011 = vadd.f32 %v2962, %v3010
    %v3012 = vpop.f32.mrf.mxu0
    %v3013 = vadd.f32 %v2964, %v3012
    %3014 = vmatmul.bf16.gmra.mxu0 %v633
    %v3015 = vpop.f32.mrf.mxu0
    %v3016 = vadd.f32 %v2967, %v3015
    %v3017 = vpop.f32.mrf.mxu0
    %v3018 = vadd.f32 %v2969, %v3017
    %3019 = vmatmul.bf16.gmra.mxu0 %v641
    %v3020 = vpop.f32.mrf.mxu0
    %v3021 = vadd.f32 %v2972, %v3020
    %v3022 = vpop.f32.mrf.mxu0
    %v3023 = vadd.f32 %v2974, %v3022
    %3024 = vmatmul.bf16.gmra.mxu0 %v649
    %v3025 = vpop.f32.mrf.mxu0
    %v3026 = vadd.f32 %v2977, %v3025
    %v3027 = vpop.f32.mrf.mxu0
    %v3028 = vadd.f32 %v2979, %v3027
    %3029 = vmatmul.bf16.gmra.mxu0 %v657
    %v3030 = vpop.f32.mrf.mxu0
    %v3031 = vadd.f32 %v2982, %v3030
    %v3032 = vpop.f32.mrf.mxu0
    %v3033 = vadd.f32 %v2984, %v3032
    %3034 = vmatmul.bf16.gmra.mxu0 %v665
    %v3035 = vpop.f32.mrf.mxu0
    %v3036 = vadd.f32 %v2987, %v3035
    %v3037 = vpop.f32.mrf.mxu0
    %v3038 = vadd.f32 %v2989, %v3037
    %3039 = vmatmul.bf16.gmra.mxu0 %v673
    %v3040 = vpop.f32.mrf.mxu0
    %v3041 = vadd.f32 %v2992, %v3040
    %v3042 = vpop.f32.mrf.mxu0
    %v3043 = vadd.f32 %v2994, %v3042
    %3044 = vmatmul.bf16.gmra.mxu0 %v681
    %v3045 = vpop.f32.mrf.mxu0
    %v3046 = vadd.f32 %v2997, %v3045
    %v3047 = vpop.f32.mrf.mxu0
    %v3048 = vadd.f32 %v2999, %v3047
    %3049 = vdwg.mxu0
    %3050 = vmatpush.bf16.msra.mxu0 %v1755
    %3051 = vmatpush.bf16.msra.mxu0 %v1752
    %3052 = vmatpush.bf16.msra.mxu0 %v1749
    %3053 = vmatpush.bf16.msra.mxu0 %v1746
    %3054 = vmatpush.bf16.msra.mxu0 %v1743
    %3055 = vmatpush.bf16.msra.mxu0 %v1740
    %3056 = vmatpush.bf16.msra.mxu0 %v1737
    %3057 = vmatpush.bf16.msra.mxu0 %v1734
    %3058 = vmatmul.bf16.gmra.mxu0 %v626
    %v3059 = vpop.f32.mrf.mxu0
    %v3060 = vadd.f32 %v3011, %v3059
    %v3061 = vpop.f32.mrf.mxu0
    %v3062 = vadd.f32 %v3013, %v3061
    %3063 = vmatmul.bf16.gmra.mxu0 %v634
    %v3064 = vpop.f32.mrf.mxu0
    %v3065 = vadd.f32 %v3016, %v3064
    %v3066 = vpop.f32.mrf.mxu0
    %v3067 = vadd.f32 %v3018, %v3066
    %3068 = vmatmul.bf16.gmra.mxu0 %v642
    %v3069 = vpop.f32.mrf.mxu0
    %v3070 = vadd.f32 %v3021, %v3069
    %v3071 = vpop.f32.mrf.mxu0
    %v3072 = vadd.f32 %v3023, %v3071
    %3073 = vmatmul.bf16.gmra.mxu0 %v650
    %v3074 = vpop.f32.mrf.mxu0
    %v3075 = vadd.f32 %v3026, %v3074
    %v3076 = vpop.f32.mrf.mxu0
    %v3077 = vadd.f32 %v3028, %v3076
    %3078 = vmatmul.bf16.gmra.mxu0 %v658
    %v3079 = vpop.f32.mrf.mxu0
    %v3080 = vadd.f32 %v3031, %v3079
    %v3081 = vpop.f32.mrf.mxu0
    %v3082 = vadd.f32 %v3033, %v3081
    %3083 = vmatmul.bf16.gmra.mxu0 %v666
    %v3084 = vpop.f32.mrf.mxu0
    %v3085 = vadd.f32 %v3036, %v3084
    %v3086 = vpop.f32.mrf.mxu0
    %v3087 = vadd.f32 %v3038, %v3086
    %3088 = vmatmul.bf16.gmra.mxu0 %v674
    %v3089 = vpop.f32.mrf.mxu0
    %v3090 = vadd.f32 %v3041, %v3089
    %v3091 = vpop.f32.mrf.mxu0
    %v3092 = vadd.f32 %v3043, %v3091
    %3093 = vmatmul.bf16.gmra.mxu0 %v682
    %v3094 = vpop.f32.mrf.mxu0
    %v3095 = vadd.f32 %v3046, %v3094
    %v3096 = vpop.f32.mrf.mxu0
    %v3097 = vadd.f32 %v3048, %v3096
    %3098 = vdwg.mxu0
    %3099 = vmatpush.bf16.msra.mxu0 %v1779
    %3100 = vmatpush.bf16.msra.mxu0 %v1776
    %3101 = vmatpush.bf16.msra.mxu0 %v1773
    %3102 = vmatpush.bf16.msra.mxu0 %v1770
    %3103 = vmatpush.bf16.msra.mxu0 %v1767
    %3104 = vmatpush.bf16.msra.mxu0 %v1764
    %3105 = vmatpush.bf16.msra.mxu0 %v1761
    %3106 = vmatpush.bf16.msra.mxu0 %v1758
    %3107 = vmatmul.bf16.gmra.mxu0 %v627
    %v3108 = vpop.f32.mrf.mxu0
    %v3109 = vadd.f32 %v3060, %v3108
    %v3110 = vpop.f32.mrf.mxu0
    %v3111 = vadd.f32 %v3062, %v3110
    %3112 = vmatmul.bf16.gmra.mxu0 %v635
    %v3113 = vpop.f32.mrf.mxu0
    %v3114 = vadd.f32 %v3065, %v3113
    %v3115 = vpop.f32.mrf.mxu0
    %v3116 = vadd.f32 %v3067, %v3115
    %3117 = vmatmul.bf16.gmra.mxu0 %v643
    %v3118 = vpop.f32.mrf.mxu0
    %v3119 = vadd.f32 %v3070, %v3118
    %v3120 = vpop.f32.mrf.mxu0
    %v3121 = vadd.f32 %v3072, %v3120
    %3122 = vmatmul.bf16.gmra.mxu0 %v651
    %v3123 = vpop.f32.mrf.mxu0
    %v3124 = vadd.f32 %v3075, %v3123
    %v3125 = vpop.f32.mrf.mxu0
    %v3126 = vadd.f32 %v3077, %v3125
    %3127 = vmatmul.bf16.gmra.mxu0 %v659
    %v3128 = vpop.f32.mrf.mxu0
    %v3129 = vadd.f32 %v3080, %v3128
    %v3130 = vpop.f32.mrf.mxu0
    %v3131 = vadd.f32 %v3082, %v3130
    %3132 = vmatmul.bf16.gmra.mxu0 %v667
    %v3133 = vpop.f32.mrf.mxu0
    %v3134 = vadd.f32 %v3085, %v3133
    %v3135 = vpop.f32.mrf.mxu0
    %v3136 = vadd.f32 %v3087, %v3135
    %3137 = vmatmul.bf16.gmra.mxu0 %v675
    %v3138 = vpop.f32.mrf.mxu0
    %v3139 = vadd.f32 %v3090, %v3138
    %v3140 = vpop.f32.mrf.mxu0
    %v3141 = vadd.f32 %v3092, %v3140
    %3142 = vmatmul.bf16.gmra.mxu0 %v683
    %v3143 = vpop.f32.mrf.mxu0
    %v3144 = vadd.f32 %v3095, %v3143
    %v3145 = vpop.f32.mrf.mxu0
    %v3146 = vadd.f32 %v3097, %v3145
    %3147 = vdwg.mxu0
    %v3148 = vmax.f32 %v2325, 0.0
    %v3149 = vmax.f32 %v2717, 0.0
    %v3150 = vmax.f32 %v3109, 0.0
    %v3151 = vmax.f32 %v2327, 0.0
    %v3152 = vmax.f32 %v2719, 0.0
    %v3153 = vmax.f32 %v3111, 0.0
    %v3154 = vmax.f32 %v2330, 0.0
    %v3155 = vmax.f32 %v2722, 0.0
    %v3156 = vmax.f32 %v3114, 0.0
    %v3157 = vmax.f32 %v2332, 0.0
    %v3158 = vmax.f32 %v2724, 0.0
    %v3159 = vmax.f32 %v3116, 0.0
    %v3160 = vmax.f32 %v2335, 0.0
    %v3161 = vmax.f32 %v2727, 0.0
    %v3162 = vmax.f32 %v3119, 0.0
    %v3163 = vmax.f32 %v2337, 0.0
    %v3164 = vmax.f32 %v2729, 0.0
    %v3165 = vmax.f32 %v3121, 0.0
    %v3166 = vmax.f32 %v2340, 0.0
    %v3167 = vmax.f32 %v2732, 0.0
    %v3168 = vmax.f32 %v3124, 0.0
    %v3169 = vmax.f32 %v2342, 0.0
    %v3170 = vmax.f32 %v2734, 0.0
    %v3171 = vmax.f32 %v3126, 0.0
    %v3172 = vmax.f32 %v2345, 0.0
    %v3173 = vmax.f32 %v2737, 0.0
    %v3174 = vmax.f32 %v3129, 0.0
    %v3175 = vmax.f32 %v2347, 0.0
    %v3176 = vmax.f32 %v2739, 0.0
    %v3177 = vmax.f32 %v3131, 0.0
    %v3178 = vmax.f32 %v2350, 0.0
    %v3179 = vmax.f32 %v2742, 0.0
    %v3180 = vmax.f32 %v3134, 0.0
    %v3181 = vmax.f32 %v2352, 0.0
    %v3182 = vmax.f32 %v2744, 0.0
    %v3183 = vmax.f32 %v3136, 0.0
    %v3184 = vmax.f32 %v2355, 0.0
    %v3185 = vmax.f32 %v2747, 0.0
    %v3186 = vmax.f32 %v3139, 0.0
    %v3187 = vmax.f32 %v2357, 0.0
    %v3188 = vmax.f32 %v2749, 0.0
    %v3189 = vmax.f32 %v3141, 0.0
    %v3190 = vmax.f32 %v2360, 0.0
    %v3191 = vmax.f32 %v2752, 0.0
    %v3192 = vmax.f32 %v3144, 0.0
    %v3193 = vmax.f32 %v2362, 0.0
    %v3194 = vmax.f32 %v2754, 0.0
    %v3195 = vmax.f32 %v3146, 0.0
    %v3196 = vld [vmem:[#allocation8] sm:$0xff]
    %v3197 = vld [vmem:[#allocation8 + $0x8] sm:$0xf]
    %v3198 = vpack.c.bf16 %v3151, %v3148
    %v3199 = vpack.c.bf16 %v3152, %v3149
    %v3200 = vpack.c.bf16 %v3153, %v3150
    %v3201 = vpack.c.bf16 %v3157, %v3154
    %v3202 = vpack.c.bf16 %v3158, %v3155
    %v3203 = vpack.c.bf16 %v3159, %v3156
    %v3204 = vpack.c.bf16 %v3163, %v3160
    %v3205 = vpack.c.bf16 %v3164, %v3161
    %v3206 = vpack.c.bf16 %v3165, %v3162
    %v3207 = vpack.c.bf16 %v3169, %v3166
    %v3208 = vpack.c.bf16 %v3170, %v3167
    %v3209 = vpack.c.bf16 %v3171, %v3168
    %v3210 = vpack.c.bf16 %v3175, %v3172
    %v3211 = vpack.c.bf16 %v3176, %v3173
    %v3212 = vpack.c.bf16 %v3177, %v3174
    %v3213 = vpack.c.bf16 %v3181, %v3178
    %v3214 = vpack.c.bf16 %v3182, %v3179
    %v3215 = vpack.c.bf16 %v3183, %v3180
    %v3216 = vpack.c.bf16 %v3187, %v3184
    %v3217 = vpack.c.bf16 %v3188, %v3185
    %v3218 = vpack.c.bf16 %v3189, %v3186
    %v3219 = vpack.c.bf16 %v3193, %v3190
    %v3220 = vpack.c.bf16 %v3194, %v3191
    %v3221 = vpack.c.bf16 %v3195, %v3192
    %v3222 = vld [vmem:[%s6] sm:$0xff]
    %3224 = vset.pattern.permute.xlu0 0
    %3225 = vperm.xlu0 %3224, %v3222
    %v3226 = vpop.permute.xlu0 %3225
    %v3230 = vunpack.c.l.b16 %v3196
    %v3231 = vunpack.c.h.b16 %v3196
    %v3232 = vunpack.c.l.b16 %v3197
    %v3233 = vpack.c.b16 %v3230, %v3230
    %v3234 = vpack.c.b16 %v3231, %v3231
    %v3235 = vpack.c.b16 %v3232, %v3232
    %3239 = vmatpush.bf16.xpose.msra.mxu0 %v3219
    %3240 = vmatpush.bf16.xpose.msra.mxu0 %v3216
    %3241 = vmatpush.bf16.xpose.msra.mxu0 %v3213
    %3242 = vmatpush.bf16.xpose.msra.mxu0 %v3210
    %3243 = vmatpush.bf16.xpose.msra.mxu0 %v3207
    %3244 = vmatpush.bf16.xpose.msra.mxu0 %v3204
    %3245 = vmatpush.bf16.xpose.msra.mxu0 %v3201
    %3246 = vmatpush.bf16.xpose.msra.mxu0 %v3198
    %3247 = vmatmul.bf16.gmra.mxu0 %v3233
    %v3248 = vpop.f32.mrf.mxu0
    %v3249 = vadd.f32 %v3226, %v3248
    %v3250 = vpop.f32.mrf.mxu0
    %3251 = vdwg.mxu0
    %3252 = vmatpush.bf16.xpose.msra.mxu0 %v3220
    %3253 = vmatpush.bf16.xpose.msra.mxu0 %v3217
    %3254 = vmatpush.bf16.xpose.msra.mxu0 %v3214
    %3255 = vmatpush.bf16.xpose.msra.mxu0 %v3211
    %3256 = vmatpush.bf16.xpose.msra.mxu0 %v3208
    %3257 = vmatpush.bf16.xpose.msra.mxu0 %v3205
    %3258 = vmatpush.bf16.xpose.msra.mxu0 %v3202
    %3259 = vmatpush.bf16.xpose.msra.mxu0 %v3199
    %3260 = vmatmul.bf16.gmra.mxu0 %v3234
    %v3261 = vpop.f32.mrf.mxu0
    %v3262 = vadd.f32 %v3249, %v3261
    %v3263 = vpop.f32.mrf.mxu0
    %3264 = vdwg.mxu0
    %3265 = vmatpush.bf16.xpose.msra.mxu0 %v3221
    %3266 = vmatpush.bf16.xpose.msra.mxu0 %v3218
    %3267 = vmatpush.bf16.xpose.msra.mxu0 %v3215
    %3268 = vmatpush.bf16.xpose.msra.mxu0 %v3212
    %3269 = vmatpush.bf16.xpose.msra.mxu0 %v3209
    %3270 = vmatpush.bf16.xpose.msra.mxu0 %v3206
    %3271 = vmatpush.bf16.xpose.msra.mxu0 %v3203
    %3272 = vmatpush.bf16.xpose.msra.mxu0 %v3200
    %3273 = vmatmul.bf16.gmra.mxu0 %v3235
    %v3274 = vpop.f32.mrf.mxu0
    %v3275 = vadd.f32 %v3262, %v3274
    %v3276 = vpop.f32.mrf.mxu0
    %3277 = vdwg.mxu0
    %v3278 = vlaneseq
    %v3279 = vshrl.u32 %v3278, 7
    %v3280 = vmax.f32 %v3275, -20.0
    %v3281 = vmin.f32 %v3280, 2.0
    %v3282 = vmul.f32 %v3281, 1.442695
    %v3283 = vpow.pop %v3282
    %vm3284 = vcmp.ge.s32.totalorder %v3279, 4
    %v3285 = vsel %vm3284, %v3283, %v3275
    %3286 = vst [vmem:[#allocation10] sm:$0xff] %v3285
    // Predicated region
    $region46: #{tpu_custom_call.1} parent=1 // pred_check
      _
    $region47: #{tpu_custom_call.1} parent=1 // pred_check_branch
      %3288 = sbr.rel (0) target = $region49
    $region48: #{tpu_custom_call.1} parent=1 // pred_region
      %3290 = vsyncadd [#allocation4], 0
      %s3292 = sshll.u32 [#allocation10], 4
      %s3293 = int_to_ptr.vmem [resolvable:$true] %s3292
      %s3294 = sshll.u32 %s7, 4
      %s3295 = int_to_ptr.hbm [resolvable:$true] %s3294
      %3297 = dma.vmem_to_hbm [thread:$0]  %s3293, 128, %s3295, [#allocation4]
    $region49: #{tpu_custom_call.1} parent=1 // pred_fallthru
      _
    // Predicated region
    $region50: #{tpu_custom_call.1} parent=1 // pred_check
      _
    $region51: #{tpu_custom_call.1} parent=1 // pred_check_branch
      %3299 = sbr.rel (0) target = $region53
    $region52: #{tpu_custom_call.1} parent=1 // pred_region
      %3301 = dma.done [#allocation4], 128
    $region53: #{tpu_custom_call.1} parent=1 // pred_fallthru
      _
    %3302 = vsyncpa [#allocation3], 1
    %3303 = vsyncpa [#allocation6], 1
    %3304 = vsyncpa [#allocation9], 1
    %3305 = vsyncpa [#allocation4], 1

</llo_original>
